<compile_context>
chip_gen: v7x
topology: tpu7x:2x2x1
jax: 0.10.0
libtpu: 0.0.40
codegen_flags: <defaults>
</compile_context>

<pallas_src>
import functools

import jax
import jax.numpy as jnp
from jax.experimental import pallas as pl
from jax.experimental.pallas import tpu as pltpu


def _round_up(x: int, m: int) -> int:
    return ((x + m - 1) // m) * m


def _has_bf16_vector_units() -> bool:
    """True on TPU generations with bf16 VPU/EUP (v6e, v7x); False on v5e etc."""
    try:
        kind = jax.devices()[0].device_kind.lower()
    except Exception:
        return False
    return any(tag in kind for tag in ("v6", "v7", "tpu7"))


def _decoder_kernel(z_ref, w1_ref, b1_ref, w2_ref, b2_ref, w3_ref, b3_ref,
                    o_ref, h_ref, *, epilogue_dtype):
    """Grid = (batch tiles i  [parallel], output-head tiles j [arbitrary])."""
    j = pl.program_id(1)

    # The two hidden layers depend only on the batch tile, not on j:
    # compute once per batch tile into a persistent VMEM scratch.
    @pl.when(j == 0)
    def _():
        z = z_ref[...]
        h = jnp.dot(z.astype(w1_ref.dtype), w1_ref[...],
                    preferred_element_type=jnp.float32)
        h = jnp.tanh(h + b1_ref[...])                      # f32 VPU/EUP math
        h = jnp.dot(h.astype(w2_ref.dtype), w2_ref[...],
                    preferred_element_type=jnp.float32)
        h = jnp.tanh(h + b2_ref[...])
        h_ref[...] = h.astype(h_ref.dtype)                 # bf16 resident hidden

    # Output-head tile: Linear + sigmoid on the (tm, tn) slice of the head.
    logits = jnp.dot(h_ref[...].astype(w3_ref.dtype), w3_ref[...],
                     preferred_element_type=jnp.float32)
    logits = logits + b3_ref[...]                          # bias-add in f32
    o_ref[...] = jax.nn.sigmoid(logits.astype(epilogue_dtype)).astype(o_ref.dtype)


def fc_decoder_forward(z, params, out_dim, *, block_b=512, block_n=2048,
                       out_dtype=jnp.bfloat16, bf16_epilogue=None):
    """Fused fcDecoderNet forward.

    z: (B, latent_dim + num_classes) f32. Class conditioning (the Concat
    module) is plain-JAX concatenation done by the caller (identity when
    num_classes == 0).
    """
    w1, b1, w2, b2, w3, b3 = params
    B, Din = z.shape
    H = w1.shape[1]
    O = w3.shape[1]

    if bf16_epilogue is None:
        bf16_epilogue = _has_bf16_vector_units()
    epilogue_dtype = (jnp.bfloat16
                      if (bf16_epilogue
                          and jnp.dtype(out_dtype) == jnp.dtype(jnp.bfloat16))
                      else jnp.float32)

    # Lane-dense output head: pad O to a multiple of 128 only if needed
    # (unmasked vst on full tiles), slice the extra columns off afterwards.
    O_pad = _round_up(O, 128)
    if O_pad != O:
        w3 = jnp.pad(w3, ((0, 0), (0, O_pad - O)))
        b3 = jnp.pad(b3, ((0, 0), (0, O_pad - O)))

    out_bytes = jnp.dtype(out_dtype).itemsize

    # Output-head tile (inner, "arbitrary"): a 128-multiple divisor of O_pad.
    tn = min(_round_up(block_n, 128), O_pad)
    while O_pad % tn != 0:
        tn -= 128

    # Batch tile (outer, "parallel"): scale up until per-step writeback is a
    # few MiB (amortizes ~0.35us per-grid-step overhead), never beyond the
    # batch, and keep >= 2 batch tiles so v7x megacore can shard the axis.
    tm = max(8, _round_up(block_b, 8))
    while tm < 2048 and tm * tn * out_bytes < (4 << 20):
        tm *= 2
    tm = min(tm, _round_up(B, 8))
    if B > 8 and pl.cdiv(B, tm) < 2:
        tm = max(8, _round_up(pl.cdiv(B, 2), 8))

    grid = (pl.cdiv(B, tm), O_pad // tn)

    # Explicit scoped-VMEM budget (resident weights counted twice for the
    # no-single-buffer fallback, double-buffered streaming tiles, scratch),
    # plus headroom; capped at the smallest physical VMEM (v7x, 64 MiB).
    const_bytes = (w1.size * w1.dtype.itemsize + b1.size * b1.dtype.itemsize +
                   w2.size * w2.dtype.itemsize + b2.size * b2.dtype.itemsize)
    stream_bytes = (2 * tm * Din * z.dtype.itemsize
                    + 2 * (H * tn * w3.dtype.itemsize + tn * b3.dtype.itemsize)
                    + 2 * tm * tn * out_bytes
                    + tm * H * 2)
    vmem_limit = min(int((2 * const_bytes + stream_bytes) * 1.25) + (2 << 20),
                     64 << 20)

    kernel = functools.partial(_decoder_kernel, epilogue_dtype=epilogue_dtype)

    def build(single_buffer_consts):
        if single_buffer_consts:
            # Block index never changes -> no benefit from double buffering;
            # Buffered(1) halves the resident-weight VMEM footprint.
            const_spec = lambda a: pl.BlockSpec(a.shape, lambda i, j: (0,) * a.ndim,
                                                pipeline_mode=pl.Buffered(1))
        else:
            const_spec = lambda a: pl.BlockSpec(a.shape, lambda i, j: (0,) * a.ndim)
        return pl.pallas_call(
            kernel,
            out_shape=jax.ShapeDtypeStruct((B, O_pad), out_dtype),
            grid_spec=pltpu.PrefetchScalarGridSpec(
                num_scalar_prefetch=0,
                grid=grid,
                in_specs=[
                    pl.BlockSpec((tm, Din), lambda i, j: (i, 0)),   # z: batch-tiled
                    const_spec(w1), const_spec(b1),                 # resident consts
                    const_spec(w2), const_spec(b2),
                    pl.BlockSpec((H, tn), lambda i, j: (0, j)),     # W3: head-tiled
                    pl.BlockSpec((1, tn), lambda i, j: (0, j)),     # b3: head-tiled
                ],
                out_specs=pl.BlockSpec((tm, tn), lambda i, j: (i, j)),
                scratch_shapes=[pltpu.VMEM((tm, H), jnp.bfloat16)], # hidden acts
            ),
            compiler_params=pltpu.CompilerParams(
                dimension_semantics=("parallel", "arbitrary"),
                vmem_limit_bytes=vmem_limit,
            ),
        )

    try:
        out2d = build(True)(z, w1, b1, w2, b2, w3, b3)
        out2d = jax.block_until_ready(out2d)
    except Exception:
        # Fallback if this JAX/Mosaic build rejects single-buffered constants.
        out2d = build(False)(z, w1, b1, w2, b2, w3, b3)

    if O_pad != O:
        out2d = out2d[:, :O]
    # unflat=True: reshape to (-1, *out_dim)  (plain-JAX glue)
    return out2d.reshape((-1,) + tuple(out_dim))


def init_params(key, latent_dim, num_classes, hidden_dim, out_prod,
                *, w_dtype=jnp.bfloat16):
    """Deterministic synthetic parameters.

    Shapes mirror nn.Linear(in, out) weight (out, in) + bias (out,), but
    weights are stored pre-transposed as (in, out) in `w_dtype` (bf16 default:
    MXU-native, half the DMA/VMEM bytes -- set jnp.float32 for strict parity)
    and biases as (1, out) f32.
    """
    in_dim = latent_dim + num_classes
    k = jax.random.split(key, 6)

    def linear(kw, kb, fan_in, fan_out):
        bound = 1.0 / jnp.sqrt(fan_in)
        w = jax.random.uniform(kw, (fan_in, fan_out), jnp.float32, -bound, bound)
        b = jax.random.uniform(kb, (1, fan_out), jnp.float32, -bound, bound)
        return w.astype(w_dtype), b

    w1, b1 = linear(k[0], k[1], in_dim, hidden_dim)
    w2, b2 = linear(k[2], k[3], hidden_dim, hidden_dim)
    w3, b3 = linear(k[4], k[5], hidden_dim, out_prod)
    return (w1, b1, w2, b2, w3, b3)


def _reference(z, params, out_dim):
    """Plain-JAX reference (bf16 MXU inputs, f32 accumulate + f32 math)."""
    w1, b1, w2, b2, w3, b3 = params
    h = jnp.tanh(jnp.dot(z.astype(w1.dtype), w1,
                         preferred_element_type=jnp.float32) + b1)
    h = jnp.tanh(jnp.dot(h.astype(w2.dtype), w2,
                         preferred_element_type=jnp.float32) + b2)
    x = jax.nn.sigmoid(jnp.dot(h.astype(w3.dtype), w3,
                               preferred_element_type=jnp.float32) + b3)
    return x.reshape((-1,) + tuple(out_dim))


if __name__ == "__main__":
    # Small shapes consistent with the module defaults:
    #   out_dim=(16, 16) image (out_prod=256, lane-aligned), latent_dim=8,
    #   num_classes=0, hidden_dim=128 (module default), num_layers=2,
    #   tanh activations, sigmoid output, unflat=True.
    # batch=200 with block_b=64 / block_n=128 exercises: batch tiling with a
    # ragged last block (no pad/slice round-trip), the output-head N-tiling
    # axis with the pl.when hidden-scratch path, weight residency, and the
    # >=2-batch-tile megacore clamp.
    out_dim = (16, 16)
    latent_dim = 8
    num_classes = 0
    hidden_dim = 128
    batch = 200

    out_prod = 1
    for d in out_dim:
        out_prod *= d

    key = jax.random.PRNGKey(0)
    kz, kp = jax.random.split(key)

    z = jax.random.normal(kz, (batch, latent_dim + num_classes), jnp.float32)
    params = init_params(kp, latent_dim, num_classes, hidden_dim, out_prod)

    x = fc_decoder_forward(z, params, out_dim, block_b=64, block_n=128)
    x = jax.block_until_ready(x)

    ref = _reference(z, params, out_dim)

    assert x.shape == (batch,) + out_dim, x.shape
    # bf16 output + (on v6e/v7x) bf16 sigmoid vs f32 reference -> loose-ish tol.
    assert jnp.allclose(x.astype(jnp.float32), ref, atol=2e-2, rtol=2e-2), \
        "mismatch vs reference"
    print("KERNEL_OK")
</pallas_src>

<mosaic_0001>
module attributes {stable_mosaic.version = 11 : i64} {
  func.func @_decoder_kernel(%arg0: i32, %arg1: i32, %arg2: memref<104x8xf32, #tpu.memory_space<vmem>>, %arg3: memref<8x128xbf16, #tpu.memory_space<vmem>>, %arg4: memref<1x128xf32, #tpu.memory_space<vmem>>, %arg5: memref<128x128xbf16, #tpu.memory_space<vmem>>, %arg6: memref<1x128xf32, #tpu.memory_space<vmem>>, %arg7: memref<128x128xbf16, #tpu.memory_space<vmem>>, %arg8: memref<1x128xf32, #tpu.memory_space<vmem>>, %arg9: memref<104x128xbf16, #tpu.memory_space<vmem>>, %arg10: memref<104x128xbf16, #tpu.memory_space<vmem>>) attributes {dimension_semantics = [#tpu.dimension_semantics<parallel>, #tpu.dimension_semantics<arbitrary>], iteration_bounds = array<i64: 2, 2>, scalar_prefetch = 0 : i64, scratch_operands = 1 : i64, tpu.core_type = #tpu.core_type<tc>, window_params = [{transform_indices = @transform_0, window_bounds = array<i64: 104, 8>}, {pipeline_mode = #tpu.pipeline_mode<synchronous>, transform_indices = @transform_1, window_bounds = array<i64: 8, 128>}, {pipeline_mode = #tpu.pipeline_mode<synchronous>, transform_indices = @transform_2, window_bounds = array<i64: 1, 128>}, {pipeline_mode = #tpu.pipeline_mode<synchronous>, transform_indices = @transform_3, window_bounds = array<i64: 128, 128>}, {pipeline_mode = #tpu.pipeline_mode<synchronous>, transform_indices = @transform_4, window_bounds = array<i64: 1, 128>}, {transform_indices = @transform_5, window_bounds = array<i64: 128, 128>}, {transform_indices = @transform_6, window_bounds = array<i64: 1, 128>}, {transform_indices = @transform_7, window_bounds = array<i64: 104, 128>}]} {
    %c0_i32 = arith.constant 0 : i32
    %0 = arith.cmpi eq, %arg1, %c0_i32 : i32
    %1 = arith.extui %0 : i1 to i32
    %c0_i32_0 = arith.constant 0 : i32
    %2 = arith.cmpi ne, %1, %c0_i32_0 : i32
    scf.if %2 {
      %c0_9 = arith.constant 0 : index
      %c0_10 = arith.constant 0 : index
      %16 = vector.load %arg2[%c0_9, %c0_10] : memref<104x8xf32, #tpu.memory_space<vmem>>, vector<104x8xf32>
      %17 = arith.truncf %16 : vector<104x8xf32> to vector<104x8xbf16>
      %c0_11 = arith.constant 0 : index
      %c0_12 = arith.constant 0 : index
      %18 = vector.load %arg3[%c0_11, %c0_12] : memref<8x128xbf16, #tpu.memory_space<vmem>>, vector<8x128xbf16>
      %cst_13 = arith.constant dense<0.000000e+00> : vector<104x128xf32>
      %19 = tpu.matmul %17, %18, %cst_13 {dimension_numbers = #tpu.dot_dimension_numbers<[1], [0], [0], [1], [0, 0, 1, 1], [], []>} : vector<104x8xbf16>, vector<8x128xbf16>, vector<104x128xf32> -> vector<104x128xf32>
      %c0_14 = arith.constant 0 : index
      %c0_15 = arith.constant 0 : index
      %20 = vector.load %arg4[%c0_14, %c0_15] : memref<1x128xf32, #tpu.memory_space<vmem>>, vector<1x128xf32>
      %21 = vector.broadcast %20 : vector<1x128xf32> to vector<104x128xf32>
      %22 = arith.addf %19, %21 : vector<104x128xf32>
      %23 = math.tanh %22 : vector<104x128xf32>
      %24 = arith.truncf %23 : vector<104x128xf32> to vector<104x128xbf16>
      %c0_16 = arith.constant 0 : index
      %c0_17 = arith.constant 0 : index
      %25 = vector.load %arg5[%c0_16, %c0_17] : memref<128x128xbf16, #tpu.memory_space<vmem>>, vector<128x128xbf16>
      %cst_18 = arith.constant dense<0.000000e+00> : vector<104x128xf32>
      %26 = tpu.matmul %24, %25, %cst_18 {dimension_numbers = #tpu.dot_dimension_numbers<[1], [0], [0], [1], [0, 0, 1, 1], [], []>} : vector<104x128xbf16>, vector<128x128xbf16>, vector<104x128xf32> -> vector<104x128xf32>
      %c0_19 = arith.constant 0 : index
      %c0_20 = arith.constant 0 : index
      %27 = vector.load %arg6[%c0_19, %c0_20] : memref<1x128xf32, #tpu.memory_space<vmem>>, vector<1x128xf32>
      %28 = vector.broadcast %27 : vector<1x128xf32> to vector<104x128xf32>
      %29 = arith.addf %26, %28 : vector<104x128xf32>
      %30 = math.tanh %29 : vector<104x128xf32>
      %31 = arith.truncf %30 : vector<104x128xf32> to vector<104x128xbf16>
      %c0_21 = arith.constant 0 : index
      %c0_22 = arith.constant 0 : index
      %32 = vector.load %arg10[%c0_21, %c0_22] : memref<104x128xbf16, #tpu.memory_space<vmem>>, vector<104x128xbf16>
      tpu.vector_store %arg10[%c0_21, %c0_22], %31 {strides = array<i32>} : memref<104x128xbf16, #tpu.memory_space<vmem>>, vector<104x128xbf16>,
    } else {
    }
    %c0 = arith.constant 0 : index
    %c0_1 = arith.constant 0 : index
    %3 = vector.load %arg10[%c0, %c0_1] : memref<104x128xbf16, #tpu.memory_space<vmem>>, vector<104x128xbf16>
    %c0_2 = arith.constant 0 : index
    %c0_3 = arith.constant 0 : index
    %4 = vector.load %arg7[%c0_2, %c0_3] : memref<128x128xbf16, #tpu.memory_space<vmem>>, vector<128x128xbf16>
    %cst = arith.constant dense<0.000000e+00> : vector<104x128xf32>
    %5 = tpu.matmul %3, %4, %cst {dimension_numbers = #tpu.dot_dimension_numbers<[1], [0], [0], [1], [0, 0, 1, 1], [], []>} : vector<104x128xbf16>, vector<128x128xbf16>, vector<104x128xf32> -> vector<104x128xf32>
    %c0_4 = arith.constant 0 : index
    %c0_5 = arith.constant 0 : index
    %6 = vector.load %arg8[%c0_4, %c0_5] : memref<1x128xf32, #tpu.memory_space<vmem>>, vector<1x128xf32>
    %7 = vector.broadcast %6 : vector<1x128xf32> to vector<104x128xf32>
    %8 = arith.addf %5, %7 : vector<104x128xf32>
    %9 = arith.negf %8 : vector<104x128xf32>
    %10 = math.exp %9 : vector<104x128xf32>
    %cst_6 = arith.constant 1.000000e+00 : f32
    %11 = vector.broadcast %cst_6 : f32 to vector<104x128xf32>
    %12 = arith.addf %11, %10 : vector<104x128xf32>
    %13 = arith.divf %11, %12 : vector<104x128xf32>
    %14 = arith.truncf %13 : vector<104x128xf32> to vector<104x128xbf16>
    %c0_7 = arith.constant 0 : index
    %c0_8 = arith.constant 0 : index
    %15 = vector.load %arg9[%c0_7, %c0_8] : memref<104x128xbf16, #tpu.memory_space<vmem>>, vector<104x128xbf16>
    tpu.vector_store %arg9[%c0_7, %c0_8], %14 {strides = array<i32>} : memref<104x128xbf16, #tpu.memory_space<vmem>>, vector<104x128xbf16>,
    return
  }
  func.func @transform_0(%arg0: i32, %arg1: i32) -> (i32, i32) {
    %c0_i32 = arith.constant 0 : i32
    %c0_i32_0 = arith.constant 0 : i32
    return %arg0, %c0_i32 : i32, i32
  }
  func.func @transform_1(%arg0: i32, %arg1: i32) -> (i32, i32) {
    %c0_i32 = arith.constant 0 : i32
    %c0_i32_0 = arith.constant 0 : i32
    %c0_i32_1 = arith.constant 0 : i32
    return %c0_i32, %c0_i32_0 : i32, i32
  }
  func.func @transform_2(%arg0: i32, %arg1: i32) -> (i32, i32) {
    %c0_i32 = arith.constant 0 : i32
    %c0_i32_0 = arith.constant 0 : i32
    %c0_i32_1 = arith.constant 0 : i32
    return %c0_i32, %c0_i32_0 : i32, i32
  }
  func.func @transform_3(%arg0: i32, %arg1: i32) -> (i32, i32) {
    %c0_i32 = arith.constant 0 : i32
    %c0_i32_0 = arith.constant 0 : i32
    %c0_i32_1 = arith.constant 0 : i32
    return %c0_i32, %c0_i32_0 : i32, i32
  }
  func.func @transform_4(%arg0: i32, %arg1: i32) -> (i32, i32) {
    %c0_i32 = arith.constant 0 : i32
    %c0_i32_0 = arith.constant 0 : i32
    %c0_i32_1 = arith.constant 0 : i32
    return %c0_i32, %c0_i32_0 : i32, i32
  }
  func.func @transform_5(%arg0: i32, %arg1: i32) -> (i32, i32) {
    %c0_i32 = arith.constant 0 : i32
    %c0_i32_0 = arith.constant 0 : i32
    return %c0_i32, %arg1 : i32, i32
  }
  func.func @transform_6(%arg0: i32, %arg1: i32) -> (i32, i32) {
    %c0_i32 = arith.constant 0 : i32
    %c0_i32_0 = arith.constant 0 : i32
    return %c0_i32, %arg1 : i32, i32
  }
  func.func @transform_7(%arg0: i32, %arg1: i32) -> (i32, i32) {
    %c0_i32 = arith.constant 0 : i32
    return %arg0, %arg1 : i32, i32
  }
}

module attributes {stable_mosaic.version = 11 : i64} {
  func.func @_decoder_kernel(%arg0: i32, %arg1: i32, %arg2: memref<104x8xf32, #tpu.memory_space<vmem>>, %arg3: memref<8x128xbf16, #tpu.memory_space<vmem>>, %arg4: memref<1x128xf32, #tpu.memory_space<vmem>>, %arg5: memref<128x128xbf16, #tpu.memory_space<vmem>>, %arg6: memref<1x128xf32, #tpu.memory_space<vmem>>, %arg7: memref<128x128xbf16, #tpu.memory_space<vmem>>, %arg8: memref<1x128xf32, #tpu.memory_space<vmem>>, %arg9: memref<104x128xbf16, #tpu.memory_space<vmem>>, %arg10: memref<104x128xbf16, #tpu.memory_space<vmem>>) attributes {dimension_semantics = [#tpu.dimension_semantics<parallel>, #tpu.dimension_semantics<arbitrary>], iteration_bounds = array<i64: 2, 2>, scalar_prefetch = 0 : i64, scratch_operands = 1 : i64, tpu.core_type = #tpu.core_type<tc>, window_params = [{transform_indices = @transform_0, window_bounds = array<i64: 104, 8>}, {pipeline_mode = #tpu.pipeline_mode<synchronous>, transform_indices = @transform_1, window_bounds = array<i64: 8, 128>}, {pipeline_mode = #tpu.pipeline_mode<synchronous>, transform_indices = @transform_2, window_bounds = array<i64: 1, 128>}, {pipeline_mode = #tpu.pipeline_mode<synchronous>, transform_indices = @transform_3, window_bounds = array<i64: 128, 128>}, {pipeline_mode = #tpu.pipeline_mode<synchronous>, transform_indices = @transform_4, window_bounds = array<i64: 1, 128>}, {transform_indices = @transform_5, window_bounds = array<i64: 128, 128>}, {transform_indices = @transform_6, window_bounds = array<i64: 1, 128>}, {transform_indices = @transform_7, window_bounds = array<i64: 104, 128>}]} {
    %c0_i32 = arith.constant 0 : i32
    %0 = arith.cmpi eq, %arg1, %c0_i32 : i32
    %1 = arith.extui %0 : i1 to i32
    %c0_i32_0 = arith.constant 0 : i32
    %2 = arith.cmpi ne, %1, %c0_i32_0 : i32
    scf.if %2 {
      %c0_9 = arith.constant 0 : index
      %c0_10 = arith.constant 0 : index
      %16 = vector.load %arg2[%c0_9, %c0_10] : memref<104x8xf32, #tpu.memory_space<vmem>>, vector<104x8xf32>
      %17 = arith.truncf %16 : vector<104x8xf32> to vector<104x8xbf16>
      %c0_11 = arith.constant 0 : index
      %c0_12 = arith.constant 0 : index
      %18 = vector.load %arg3[%c0_11, %c0_12] : memref<8x128xbf16, #tpu.memory_space<vmem>>, vector<8x128xbf16>
      %cst_13 = arith.constant dense<0.000000e+00> : vector<104x128xf32>
      %19 = tpu.matmul %17, %18, %cst_13 {dimension_numbers = #tpu.dot_dimension_numbers<[1], [0], [0], [1], [0, 0, 1, 1], [], []>} : vector<104x8xbf16>, vector<8x128xbf16>, vector<104x128xf32> -> vector<104x128xf32>
      %c0_14 = arith.constant 0 : index
      %c0_15 = arith.constant 0 : index
      %20 = vector.load %arg4[%c0_14, %c0_15] : memref<1x128xf32, #tpu.memory_space<vmem>>, vector<1x128xf32>
      %21 = vector.broadcast %20 : vector<1x128xf32> to vector<104x128xf32>
      %22 = arith.addf %19, %21 : vector<104x128xf32>
      %23 = math.tanh %22 : vector<104x128xf32>
      %24 = arith.truncf %23 : vector<104x128xf32> to vector<104x128xbf16>
      %c0_16 = arith.constant 0 : index
      %c0_17 = arith.constant 0 : index
      %25 = vector.load %arg5[%c0_16, %c0_17] : memref<128x128xbf16, #tpu.memory_space<vmem>>, vector<128x128xbf16>
      %cst_18 = arith.constant dense<0.000000e+00> : vector<104x128xf32>
      %26 = tpu.matmul %24, %25, %cst_18 {dimension_numbers = #tpu.dot_dimension_numbers<[1], [0], [0], [1], [0, 0, 1, 1], [], []>} : vector<104x128xbf16>, vector<128x128xbf16>, vector<104x128xf32> -> vector<104x128xf32>
      %c0_19 = arith.constant 0 : index
      %c0_20 = arith.constant 0 : index
      %27 = vector.load %arg6[%c0_19, %c0_20] : memref<1x128xf32, #tpu.memory_space<vmem>>, vector<1x128xf32>
      %28 = vector.broadcast %27 : vector<1x128xf32> to vector<104x128xf32>
      %29 = arith.addf %26, %28 : vector<104x128xf32>
      %30 = math.tanh %29 : vector<104x128xf32>
      %31 = arith.truncf %30 : vector<104x128xf32> to vector<104x128xbf16>
      %c0_21 = arith.constant 0 : index
      %c0_22 = arith.constant 0 : index
      %32 = vector.load %arg10[%c0_21, %c0_22] : memref<104x128xbf16, #tpu.memory_space<vmem>>, vector<104x128xbf16>
      tpu.vector_store %arg10[%c0_21, %c0_22], %31 {strides = array<i32>} : memref<104x128xbf16, #tpu.memory_space<vmem>>, vector<104x128xbf16>,
    } else {
    }
    %c0 = arith.constant 0 : index
    %c0_1 = arith.constant 0 : index
    %3 = vector.load %arg10[%c0, %c0_1] : memref<104x128xbf16, #tpu.memory_space<vmem>>, vector<104x128xbf16>
    %c0_2 = arith.constant 0 : index
    %c0_3 = arith.constant 0 : index
    %4 = vector.load %arg7[%c0_2, %c0_3] : memref<128x128xbf16, #tpu.memory_space<vmem>>, vector<128x128xbf16>
    %cst = arith.constant dense<0.000000e+00> : vector<104x128xf32>
    %5 = tpu.matmul %3, %4, %cst {dimension_numbers = #tpu.dot_dimension_numbers<[1], [0], [0], [1], [0, 0, 1, 1], [], []>} : vector<104x128xbf16>, vector<128x128xbf16>, vector<104x128xf32> -> vector<104x128xf32>
    %c0_4 = arith.constant 0 : index
    %c0_5 = arith.constant 0 : index
    %6 = vector.load %arg8[%c0_4, %c0_5] : memref<1x128xf32, #tpu.memory_space<vmem>>, vector<1x128xf32>
    %7 = vector.broadcast %6 : vector<1x128xf32> to vector<104x128xf32>
    %8 = arith.addf %5, %7 : vector<104x128xf32>
    %9 = arith.negf %8 : vector<104x128xf32>
    %10 = math.exp %9 : vector<104x128xf32>
    %cst_6 = arith.constant 1.000000e+00 : f32
    %11 = vector.broadcast %cst_6 : f32 to vector<104x128xf32>
    %12 = arith.addf %11, %10 : vector<104x128xf32>
    %13 = arith.divf %11, %12 : vector<104x128xf32>
    %14 = arith.truncf %13 : vector<104x128xf32> to vector<104x128xbf16>
    %c0_7 = arith.constant 0 : index
    %c0_8 = arith.constant 0 : index
    %15 = vector.load %arg9[%c0_7, %c0_8] : memref<104x128xbf16, #tpu.memory_space<vmem>>, vector<104x128xbf16>
    tpu.vector_store %arg9[%c0_7, %c0_8], %14 {strides = array<i32>} : memref<104x128xbf16, #tpu.memory_space<vmem>>, vector<104x128xbf16>,
    return
  }
  func.func @transform_0(%arg0: i32, %arg1: i32) -> (i32, i32) {
    %c0_i32 = arith.constant 0 : i32
    %c0_i32_0 = arith.constant 0 : i32
    return %arg0, %c0_i32 : i32, i32
  }
  func.func @transform_1(%arg0: i32, %arg1: i32) -> (i32, i32) {
    %c0_i32 = arith.constant 0 : i32
    %c0_i32_0 = arith.constant 0 : i32
    %c0_i32_1 = arith.constant 0 : i32
    return %c0_i32, %c0_i32_0 : i32, i32
  }
  func.func @transform_2(%arg0: i32, %arg1: i32) -> (i32, i32) {
    %c0_i32 = arith.constant 0 : i32
    %c0_i32_0 = arith.constant 0 : i32
    %c0_i32_1 = arith.constant 0 : i32
    return %c0_i32, %c0_i32_0 : i32, i32
  }
  func.func @transform_3(%arg0: i32, %arg1: i32) -> (i32, i32) {
    %c0_i32 = arith.constant 0 : i32
    %c0_i32_0 = arith.constant 0 : i32
    %c0_i32_1 = arith.constant 0 : i32
    return %c0_i32, %c0_i32_0 : i32, i32
  }
  func.func @transform_4(%arg0: i32, %arg1: i32) -> (i32, i32) {
    %c0_i32 = arith.constant 0 : i32
    %c0_i32_0 = arith.constant 0 : i32
    %c0_i32_1 = arith.constant 0 : i32
    return %c0_i32, %c0_i32_0 : i32, i32
  }
  func.func @transform_5(%arg0: i32, %arg1: i32) -> (i32, i32) {
    %c0_i32 = arith.constant 0 : i32
    %c0_i32_0 = arith.constant 0 : i32
    return %c0_i32, %arg1 : i32, i32
  }
  func.func @transform_6(%arg0: i32, %arg1: i32) -> (i32, i32) {
    %c0_i32 = arith.constant 0 : i32
    %c0_i32_0 = arith.constant 0 : i32
    return %c0_i32, %arg1 : i32, i32
  }
  func.func @transform_7(%arg0: i32, %arg1: i32) -> (i32, i32) {
    %c0_i32 = arith.constant 0 : i32
    return %arg0, %arg1 : i32, i32
  }
}

</mosaic_0001>

<llo_original>
// kernel: tpu_custom_call.1
$region0: #{tpu_custom_call.1}
  #allocation0 [shape = 'u32[]', space=smem, size = 0x4, offset = 0x4, fixed_abs, tag = 'smem constant byte address 0x4 - core index']
  #allocation1 [shape = 'u32[144,128]{1,0:T(1,128)}', space=vmem, size = 0x12000, scoped, tag = 'internal scratch']
  #allocation2 [shape = 'bf16[104,128]{1,0:T(8,128)(2,1)}', space=vmem, size = 0x6800, scoped, tag = 'scratch operand']
  %s0 = inlined_call_operand.vmem [shape: f32[200,8], index: 0, kind: input, shape index: {}]
  %s1 = inlined_call_operand.vmem [shape: bf16[8,128], index: 1, kind: input, shape index: {}]
  %s2 = inlined_call_operand.vmem [shape: f32[1,128], index: 2, kind: input, shape index: {}]
  %s3 = inlined_call_operand.vmem [shape: bf16[128,128], index: 3, kind: input, shape index: {}]
  %s4 = inlined_call_operand.vmem [shape: f32[1,128], index: 4, kind: input, shape index: {}]
  %s5 = inlined_call_operand.vmem [shape: bf16[128,256], index: 5, kind: input, shape index: {}]
  %s6 = inlined_call_operand.vmem [shape: f32[1,256], index: 6, kind: input, shape index: {}]
  %s7 = inlined_call_operand.hbm [shape: bf16[200,256], index: 7, kind: output, shape index: {}]
  %s8 = sld [smem:[#allocation0]]
  $region106: #{tpu_custom_call.1} parent=0
    _
  %s10 = ssub.s32 1, %s8
  %s11 = scalar_select 0, %s10, %s8
  $region1: #{tpu_custom_call.1} parent=0
    #allocation3 [shape = 'u8[65536]{0}', space=vmem, size = 0x10000, scoped, tag = 'input window, operand 5']
    #allocation4 [shape = 'u8[53248]{0}', space=vmem, size = 0xd000, scoped, tag = 'output window, operand 0']
    #allocation5 [shape = 's32[2]{0}', space=sflag, size = 0x8, scoped, tag = 'scoped memory for tpu_custom_call.1']
    %12 = vsyncpa [#allocation5], 0
    %s13 = scalar_lea.sflag [#allocation5], 1
    %14 = vsyncpa %s13, 0
    loop: start=0, step=1, limit=6
    $region2: #{tpu_custom_call.1} parent=1 // loop_pre_header
      _
    $region3: #{tpu_custom_call.1} parent=1 // loop_header
      %s16 = sphi 0, %s20
      %p17 = scmp.ge.s32.totalorder %s16, 6
      %s23 = sphi 0, %s35
      %s24 = sphi 0, %s31
      %s25 = sphi 0, %s23
      %s26 = sphi 0, %s24
      %s27 = sphi 0, %s25
      %s28 = sphi 0, %s26
      %s38 = sphi 0, %s40
      %s41 = sphi 0, %s38
      %s42 = sphi 0, %s41
      %s58 = sphi 0, %s42
      %s62 = sphi 0, %s62
      %s64 = sphi 0, %s62
      %s65 = sphi 0, %s64
      %s79 = sphi 0, %s65
      %s83 = sphi 0, %s83
      %s85 = sphi 0, %s83
      %s86 = sphi 0, %s85
      %s100 = sphi 0, %s86
      %s104 = sphi 0, %s104
      %s106 = sphi 0, %s104
      %s107 = sphi 0, %s106
      %s121 = sphi 0, %s107
      %s125 = sphi 0, %s125
      %s127 = sphi 0, %s125
      %s128 = sphi 0, %s127
      %s142 = sphi 0, %s128
      %s148 = sphi 0, %s150
      %s151 = sphi 0, %s148
      %s152 = sphi 0, %s151
      %s168 = sphi 0, %s152
      %s174 = sphi 0, %s176
      %s177 = sphi 0, %s174
      %s178 = sphi 0, %s177
      %s194 = sphi 0, %s178
      %s202 = sphi 0, %s204
      %s205 = sphi 0, %s202
      %s206 = sphi 0, %s205
      %s222 = sphi 0, %s206
    $region4: #{tpu_custom_call.1} parent=1 // loop_header_branch
      %19 = sbr.rel (%p17) target = $region8
    $region5: #{tpu_custom_call.1} parent=1 // loop_body
      %s21 = ssub.s32 %s16, 1
      %s22 = ssub.s32 %s16, 2
      %s29 = sadd.s32 1, %s24
      %p30 = scmp.ge.s32.totalorder %s29, 2
      %s31 = scalar_select %p30, 0, %s29
      %s32 = sadd.s32 1, %s23
      %s33 = scalar_select %p30, %s32, %s23
      %p34 = scmp.ge.s32.totalorder %s33, 2
      %s35 = scalar_select %p34, 0, %s33
      %s36 = ssub.s32 %s23, %s35
      %p37 = scmp.eq.s32.totalorder %s36, 0
      %s39 = sadd.s32 %s38, 1
      %s40 = scalar_select %p37, %s38, %s39
      %p43 = pneg %p37
      %p44 = scmp.eq.s32.totalorder %s16, 3
      %p45 = por %p43, %p44
      %p46 = scmp.ne.s32.totalorder %s38, %s41
      %p47 = scmp.eq.s32.totalorder %s16, 0
      %p48 = por %p46, %p47
      %p49 = scmp.ne.s32.totalorder %s38, %s41
      %p50 = scmp.eq.s32.totalorder %s21, 3
      %p51 = por %p49, %p50
      %p52 = scmp.ne.s32.totalorder %s41, %s42
      %p53 = scmp.eq.s32.totalorder %s21, 0
      %p54 = por %p52, %p53
      %p55 = scmp.ne.s32.totalorder %s41, %s42
      %p56 = scmp.eq.s32.totalorder %s22, 3
      %p57 = por %p55, %p56
      %p59 = scmp.ne.s32.totalorder %s42, %s58
      %p60 = scmp.eq.s32.totalorder %s22, 0
      %p61 = por %p59, %p60
      %s63 = sadd.s32 %s62, 1
      %p66 = scmp.eq.s32.totalorder %s16, 3
      %p67 = scmp.ne.s32.totalorder %s62, %s64
      %p68 = scmp.eq.s32.totalorder %s16, 0
      %p69 = por %p67, %p68
      %p70 = scmp.ne.s32.totalorder %s62, %s64
      %p71 = scmp.eq.s32.totalorder %s21, 3
      %p72 = por %p70, %p71
      %p73 = scmp.ne.s32.totalorder %s64, %s65
      %p74 = scmp.eq.s32.totalorder %s21, 0
      %p75 = por %p73, %p74
      %p76 = scmp.ne.s32.totalorder %s64, %s65
      %p77 = scmp.eq.s32.totalorder %s22, 3
      %p78 = por %p76, %p77
      %p80 = scmp.ne.s32.totalorder %s65, %s79
      %p81 = scmp.eq.s32.totalorder %s22, 0
      %p82 = por %p80, %p81
      %s84 = sadd.s32 %s83, 1
      %p87 = scmp.eq.s32.totalorder %s16, 3
      %p88 = scmp.ne.s32.totalorder %s83, %s85
      %p89 = scmp.eq.s32.totalorder %s16, 0
      %p90 = por %p88, %p89
      %p91 = scmp.ne.s32.totalorder %s83, %s85
      %p92 = scmp.eq.s32.totalorder %s21, 3
      %p93 = por %p91, %p92
      %p94 = scmp.ne.s32.totalorder %s85, %s86
      %p95 = scmp.eq.s32.totalorder %s21, 0
      %p96 = por %p94, %p95
      %p97 = scmp.ne.s32.totalorder %s85, %s86
      %p98 = scmp.eq.s32.totalorder %s22, 3
      %p99 = por %p97, %p98
      %p101 = scmp.ne.s32.totalorder %s86, %s100
      %p102 = scmp.eq.s32.totalorder %s22, 0
      %p103 = por %p101, %p102
      %s105 = sadd.s32 %s104, 1
      %p108 = scmp.eq.s32.totalorder %s16, 3
      %p109 = scmp.ne.s32.totalorder %s104, %s106
      %p110 = scmp.eq.s32.totalorder %s16, 0
      %p111 = por %p109, %p110
      %p112 = scmp.ne.s32.totalorder %s104, %s106
      %p113 = scmp.eq.s32.totalorder %s21, 3
      %p114 = por %p112, %p113
      %p115 = scmp.ne.s32.totalorder %s106, %s107
      %p116 = scmp.eq.s32.totalorder %s21, 0
      %p117 = por %p115, %p116
      %p118 = scmp.ne.s32.totalorder %s106, %s107
      %p119 = scmp.eq.s32.totalorder %s22, 3
      %p120 = por %p118, %p119
      %p122 = scmp.ne.s32.totalorder %s107, %s121
      %p123 = scmp.eq.s32.totalorder %s22, 0
      %p124 = por %p122, %p123
      %s126 = sadd.s32 %s125, 1
      %p129 = scmp.eq.s32.totalorder %s16, 3
      %p130 = scmp.ne.s32.totalorder %s125, %s127
      %p131 = scmp.eq.s32.totalorder %s16, 0
      %p132 = por %p130, %p131
      %p133 = scmp.ne.s32.totalorder %s125, %s127
      %p134 = scmp.eq.s32.totalorder %s21, 3
      %p135 = por %p133, %p134
      %p136 = scmp.ne.s32.totalorder %s127, %s128
      %p137 = scmp.eq.s32.totalorder %s21, 0
      %p138 = por %p136, %p137
      %p139 = scmp.ne.s32.totalorder %s127, %s128
      %p140 = scmp.eq.s32.totalorder %s22, 3
      %p141 = por %p139, %p140
      %p143 = scmp.ne.s32.totalorder %s128, %s142
      %p144 = scmp.eq.s32.totalorder %s22, 0
      %p145 = por %p143, %p144
      %s146 = ssub.s32 %s24, %s31
      %p147 = scmp.eq.s32.totalorder %s146, 0
      %s149 = sadd.s32 %s148, 1
      %s150 = scalar_select %p147, %s148, %s149
      %p153 = pneg %p147
      %p154 = scmp.eq.s32.totalorder %s16, 3
      %p155 = por %p153, %p154
      %p156 = scmp.ne.s32.totalorder %s148, %s151
      %p157 = scmp.eq.s32.totalorder %s16, 0
      %p158 = por %p156, %p157
      %p159 = scmp.ne.s32.totalorder %s148, %s151
      %p160 = scmp.eq.s32.totalorder %s21, 3
      %p161 = por %p159, %p160
      %p162 = scmp.ne.s32.totalorder %s151, %s152
      %p163 = scmp.eq.s32.totalorder %s21, 0
      %p164 = por %p162, %p163
      %p165 = scmp.ne.s32.totalorder %s151, %s152
      %p166 = scmp.eq.s32.totalorder %s22, 3
      %p167 = por %p165, %p166
      %p169 = scmp.ne.s32.totalorder %s152, %s168
      %p170 = scmp.eq.s32.totalorder %s22, 0
      %p171 = por %p169, %p170
      %s172 = ssub.s32 %s24, %s31
      %p173 = scmp.eq.s32.totalorder %s172, 0
      %s175 = sadd.s32 %s174, 1
      %s176 = scalar_select %p173, %s174, %s175
      %p179 = pneg %p173
      %p180 = scmp.eq.s32.totalorder %s16, 3
      %p181 = por %p179, %p180
      %p182 = scmp.ne.s32.totalorder %s174, %s177
      %p183 = scmp.eq.s32.totalorder %s16, 0
      %p184 = por %p182, %p183
      %p185 = scmp.ne.s32.totalorder %s174, %s177
      %p186 = scmp.eq.s32.totalorder %s21, 3
      %p187 = por %p185, %p186
      %p188 = scmp.ne.s32.totalorder %s177, %s178
      %p189 = scmp.eq.s32.totalorder %s21, 0
      %p190 = por %p188, %p189
      %p191 = scmp.ne.s32.totalorder %s177, %s178
      %p192 = scmp.eq.s32.totalorder %s22, 3
      %p193 = por %p191, %p192
      %p195 = scmp.ne.s32.totalorder %s178, %s194
      %p196 = scmp.eq.s32.totalorder %s22, 0
      %p197 = por %p195, %p196
      %s198 = ssub.s32 %s23, %s35
      %s199 = ssub.s32 %s24, %s31
      %s200 = sor.u32 %s198, %s199
      %p201 = scmp.eq.s32.totalorder %s200, 0
      %s203 = sadd.s32 %s202, 1
      %s204 = scalar_select %p201, %s202, %s203
      %p207 = pneg %p201
      %p208 = scmp.eq.s32.totalorder %s16, 3
      %p209 = por %p207, %p208
      %p210 = scmp.ne.s32.totalorder %s202, %s205
      %p211 = scmp.eq.s32.totalorder %s16, 0
      %p212 = por %p210, %p211
      %p213 = scmp.ne.s32.totalorder %s202, %s205
      %p214 = scmp.eq.s32.totalorder %s21, 3
      %p215 = por %p213, %p214
      %p216 = scmp.ne.s32.totalorder %s205, %s206
      %p217 = scmp.eq.s32.totalorder %s21, 0
      %p218 = por %p216, %p217
      %p219 = scmp.ne.s32.totalorder %s205, %s206
      %p220 = scmp.eq.s32.totalorder %s22, 3
      %p221 = por %p219, %p220
      %p223 = scmp.ne.s32.totalorder %s206, %s222
      %p224 = scmp.eq.s32.totalorder %s22, 0
      %p225 = por %p223, %p224
      %p226 = scmp.le.s32.totalorder 1, %s16
      %p227 = scmp.lt.s32.totalorder %s16, 5
      %p228 = pnand %p226, %p227
      %p229 = pneg %p228
      // Predicated region
      $region9: #{tpu_custom_call.1} parent=5 // pred_check
        _
      $region10: #{tpu_custom_call.1} parent=5 // pred_check_branch
        %231 = sbr.rel (%p228) target = $region12
      $region11: #{tpu_custom_call.1} parent=5 // pred_region
        %s232 = ssub.s32 %s16, 1
        // Predicated region
        $region13: #{tpu_custom_call.1} parent=11 // pred_check
          %p233 = pneg %p75
        $region14: #{tpu_custom_call.1} parent=11 // pred_check_branch
          %235 = sbr.rel (%p233) target = $region16
        $region15: #{tpu_custom_call.1} parent=11 // pred_region
          _
        $region16: #{tpu_custom_call.1} parent=11 // pred_fallthru
          _
        // Predicated region
        $region17: #{tpu_custom_call.1} parent=11 // pred_check
          %p236 = pneg %p96
        $region18: #{tpu_custom_call.1} parent=11 // pred_check_branch
          %238 = sbr.rel (%p236) target = $region20
        $region19: #{tpu_custom_call.1} parent=11 // pred_region
          _
        $region20: #{tpu_custom_call.1} parent=11 // pred_fallthru
          _
        // Predicated region
        $region21: #{tpu_custom_call.1} parent=11 // pred_check
          %p239 = pneg %p117
        $region22: #{tpu_custom_call.1} parent=11 // pred_check_branch
          %241 = sbr.rel (%p239) target = $region24
        $region23: #{tpu_custom_call.1} parent=11 // pred_region
          _
        $region24: #{tpu_custom_call.1} parent=11 // pred_fallthru
          _
        // Predicated region
        $region25: #{tpu_custom_call.1} parent=11 // pred_check
          %p242 = pneg %p138
        $region26: #{tpu_custom_call.1} parent=11 // pred_check_branch
          %244 = sbr.rel (%p242) target = $region28
        $region27: #{tpu_custom_call.1} parent=11 // pred_region
          _
        $region28: #{tpu_custom_call.1} parent=11 // pred_fallthru
          _
      $region12: #{tpu_custom_call.1} parent=5 // pred_fallthru
        _
      %p245 = scmp.lt.s32.totalorder %s16, 4
      // Predicated region
      $region29: #{tpu_custom_call.1} parent=5 // pred_check
        %p246 = pneg %p245
      $region30: #{tpu_custom_call.1} parent=5 // pred_check_branch
        %248 = sbr.rel (%p246) target = $region32
      $region31: #{tpu_custom_call.1} parent=5 // pred_region
        // Predicated region
        $region33: #{tpu_custom_call.1} parent=31 // pred_check
          %p249 = pneg %p48
        $region34: #{tpu_custom_call.1} parent=31 // pred_check_branch
          %251 = sbr.rel (%p249) target = $region36
        $region35: #{tpu_custom_call.1} parent=31 // pred_region
          %s252 = smul.u32 13, %s23
          %s253 = ssub.s32 25, %s252
          %p254 = scmp.lt.s32.totalorder %s253, 13
          %s255 = scalar_select %p254, %s253, 13
          %s256 = smul.u32 128, %s255
          %p257 = scmp.lt.s32.totalorder %s252, 24
          %s258 = scalar_select %p257, %s252, 24
          %s259 = smul.addr %s258, 8
          %s260 = scalar_lea.vmem %s0, %s259
          %s261 = smul.u32 13, %s23
          %s262 = ssub.s32 25, %s261
          %p263 = scmp.lt.s32.totalorder %s262, 13
          %s264 = scalar_select %p263, %s262, 13
          %s265 = smul.u32 128, %s264
        $region36: #{tpu_custom_call.1} parent=31 // pred_fallthru
          _
        // Predicated region
        $region37: #{tpu_custom_call.1} parent=31 // pred_check
          %p266 = pneg %p158
        $region38: #{tpu_custom_call.1} parent=31 // pred_check_branch
          %268 = sbr.rel (%p266) target = $region40
        $region39: #{tpu_custom_call.1} parent=31 // pred_region
          %s269 = sand.u32 %s148, 1
          %s270 = sand.u32 %s148, 1
          %s271 = smul.addr %s270, 64
          %s272 = scalar_lea.vmem [#allocation3], %s271
          %s273 = smul.addr %s24, 4
          %s274 = scalar_lea.vmem %s5, %s273
          // Predicated region
          $region41: #{tpu_custom_call.1} parent=39 // pred_check
            _
          $region42: #{tpu_custom_call.1} parent=39 // pred_check_branch
            %276 = sbr.rel (0) target = $region44
          $region43: #{tpu_custom_call.1} parent=39 // pred_region
            // Predicated region
            $region45: #{tpu_custom_call.1} parent=43 // pred_check
              _
            $region46: #{tpu_custom_call.1} parent=43 // pred_check_branch
              %278 = sbr.rel target = $region48
            $region47: #{tpu_custom_call.1} parent=43 // pred_region
              // Predicated region
              $region60: #{tpu_custom_call.1} parent=47 // pred_check
                _
              $region61: #{tpu_custom_call.1} parent=47 // pred_check_branch
                %323 = sbr.rel (0) target = $region63
              $region62: #{tpu_custom_call.1} parent=47 // pred_region
                loop: start=0, step=1, limit=1
                $region64: #{tpu_custom_call.1} parent=62 // loop_pre_header
                  _
                $region65: #{tpu_custom_call.1} parent=62 // loop_header
                  %s325 = sphi 0, %s329
                  %p326 = scmp.ge.s32.totalorder %s325, 1
                  %s330 = sphi %s274, %s274
                  %s331 = sphi %s272, %s272
                $region66: #{tpu_custom_call.1} parent=62 // loop_header_branch
                  %328 = sbr.rel (%p326) target = $region70
                $region67: #{tpu_custom_call.1} parent=62 // loop_body
                  _
                $region68: #{tpu_custom_call.1} parent=62 // loop_footer
                  %s329 = sadd.s32 1, %s325
                $region69: #{tpu_custom_call.1} parent=62 // loop_footer_branch
                  %324 = sbr.rel target = $region65
                $region70: #{tpu_custom_call.1} parent=62 // loop_exit
                  _
                loop: start=0, step=1, limit=1
                $region71: #{tpu_custom_call.1} parent=62 // loop_pre_header
                  _
                $region72: #{tpu_custom_call.1} parent=62 // loop_header
                  %s334 = sphi 0, %s338
                  %p335 = scmp.ge.s32.totalorder %s334, 1
                  %s339 = sphi %s274, %s274
                  %s340 = sphi %s272, %s272
                $region73: #{tpu_custom_call.1} parent=62 // loop_header_branch
                  %337 = sbr.rel (%p335) target = $region77
                $region74: #{tpu_custom_call.1} parent=62 // loop_body
                  %v341 = vld [vmem:[%s339] sm:$0xf]
                  %342 = vst [vmem:[%s340] sm:$0xf] %v341
                  %v343 = vld [vmem:[%s339 + $0x8] sm:$0xf]
                  %344 = vst [vmem:[%s340 + $0x4] sm:$0xf] %v343
                  %v345 = vld [vmem:[%s339 + $0x10] sm:$0xf]
                  %346 = vst [vmem:[%s340 + $0x8] sm:$0xf] %v345
                  %v347 = vld [vmem:[%s339 + $0x18] sm:$0xf]
                  %348 = vst [vmem:[%s340 + $0xc] sm:$0xf] %v347
                  %v349 = vld [vmem:[%s339 + $0x20] sm:$0xf]
                  %350 = vst [vmem:[%s340 + $0x10] sm:$0xf] %v349
                  %v351 = vld [vmem:[%s339 + $0x28] sm:$0xf]
                  %352 = vst [vmem:[%s340 + $0x14] sm:$0xf] %v351
                  %v353 = vld [vmem:[%s339 + $0x30] sm:$0xf]
                  %354 = vst [vmem:[%s340 + $0x18] sm:$0xf] %v353
                  %v355 = vld [vmem:[%s339 + $0x38] sm:$0xf]
                  %356 = vst [vmem:[%s340 + $0x1c] sm:$0xf] %v355
                  %v357 = vld [vmem:[%s339 + $0x40] sm:$0xf]
                  %358 = vst [vmem:[%s340 + $0x20] sm:$0xf] %v357
                  %v359 = vld [vmem:[%s339 + $0x48] sm:$0xf]
                  %360 = vst [vmem:[%s340 + $0x24] sm:$0xf] %v359
                  %v361 = vld [vmem:[%s339 + $0x50] sm:$0xf]
                  %362 = vst [vmem:[%s340 + $0x28] sm:$0xf] %v361
                  %v363 = vld [vmem:[%s339 + $0x58] sm:$0xf]
                  %364 = vst [vmem:[%s340 + $0x2c] sm:$0xf] %v363
                  %v365 = vld [vmem:[%s339 + $0x60] sm:$0xf]
                  %366 = vst [vmem:[%s340 + $0x30] sm:$0xf] %v365
                  %v367 = vld [vmem:[%s339 + $0x68] sm:$0xf]
                  %368 = vst [vmem:[%s340 + $0x34] sm:$0xf] %v367
                  %v369 = vld [vmem:[%s339 + $0x70] sm:$0xf]
                  %370 = vst [vmem:[%s340 + $0x38] sm:$0xf] %v369
                  %v371 = vld [vmem:[%s339 + $0x78] sm:$0xf]
                  %372 = vst [vmem:[%s340 + $0x3c] sm:$0xf] %v371
                $region75: #{tpu_custom_call.1} parent=62 // loop_footer
                  %s338 = sadd.s32 1, %s334
                $region76: #{tpu_custom_call.1} parent=62 // loop_footer_branch
                  %333 = sbr.rel target = $region72
                $region77: #{tpu_custom_call.1} parent=62 // loop_exit
                  _
              $region63: #{tpu_custom_call.1} parent=47 // pred_fallthru
                _
            $region48: #{tpu_custom_call.1} parent=43 // pred_fallthru
              _
            // Predicated region
            $region49: #{tpu_custom_call.1} parent=43 // pred_check
              _
            $region50: #{tpu_custom_call.1} parent=43 // pred_check_branch
              %280 = sbr.rel (0) target = $region52
            $region51: #{tpu_custom_call.1} parent=43 // pred_region
              loop: start=0, step=1, limit=1
              $region53: #{tpu_custom_call.1} parent=51 // loop_pre_header
                _
              $region54: #{tpu_custom_call.1} parent=51 // loop_header
                %s283 = sphi 0, %s287
                %p284 = scmp.ge.s32.totalorder %s283, 1
                %s288 = sphi %s274, %s274
                %s289 = sphi %s272, %s272
              $region55: #{tpu_custom_call.1} parent=51 // loop_header_branch
                %286 = sbr.rel (%p284) target = $region59
              $region56: #{tpu_custom_call.1} parent=51 // loop_body
                %v290 = vld [vmem:[%s288] sm:$0xf]
                %291 = vst [vmem:[%s289] sm:$0xf] %v290
                %v292 = vld [vmem:[%s288 + $0x8] sm:$0xf]
                %293 = vst [vmem:[%s289 + $0x4] sm:$0xf] %v292
                %v294 = vld [vmem:[%s288 + $0x10] sm:$0xf]
                %295 = vst [vmem:[%s289 + $0x8] sm:$0xf] %v294
                %v296 = vld [vmem:[%s288 + $0x18] sm:$0xf]
                %297 = vst [vmem:[%s289 + $0xc] sm:$0xf] %v296
                %v298 = vld [vmem:[%s288 + $0x20] sm:$0xf]
                %299 = vst [vmem:[%s289 + $0x10] sm:$0xf] %v298
                %v300 = vld [vmem:[%s288 + $0x28] sm:$0xf]
                %301 = vst [vmem:[%s289 + $0x14] sm:$0xf] %v300
                %v302 = vld [vmem:[%s288 + $0x30] sm:$0xf]
                %303 = vst [vmem:[%s289 + $0x18] sm:$0xf] %v302
                %v304 = vld [vmem:[%s288 + $0x38] sm:$0xf]
                %305 = vst [vmem:[%s289 + $0x1c] sm:$0xf] %v304
                %v306 = vld [vmem:[%s288 + $0x40] sm:$0xf]
                %307 = vst [vmem:[%s289 + $0x20] sm:$0xf] %v306
                %v308 = vld [vmem:[%s288 + $0x48] sm:$0xf]
                %309 = vst [vmem:[%s289 + $0x24] sm:$0xf] %v308
                %v310 = vld [vmem:[%s288 + $0x50] sm:$0xf]
                %311 = vst [vmem:[%s289 + $0x28] sm:$0xf] %v310
                %v312 = vld [vmem:[%s288 + $0x58] sm:$0xf]
                %313 = vst [vmem:[%s289 + $0x2c] sm:$0xf] %v312
                %v314 = vld [vmem:[%s288 + $0x60] sm:$0xf]
                %315 = vst [vmem:[%s289 + $0x30] sm:$0xf] %v314
                %v316 = vld [vmem:[%s288 + $0x68] sm:$0xf]
                %317 = vst [vmem:[%s289 + $0x34] sm:$0xf] %v316
                %v318 = vld [vmem:[%s288 + $0x70] sm:$0xf]
                %319 = vst [vmem:[%s289 + $0x38] sm:$0xf] %v318
                %v320 = vld [vmem:[%s288 + $0x78] sm:$0xf]
                %321 = vst [vmem:[%s289 + $0x3c] sm:$0xf] %v320
              $region57: #{tpu_custom_call.1} parent=51 // loop_footer
                %s287 = sadd.s32 1, %s283
              $region58: #{tpu_custom_call.1} parent=51 // loop_footer_branch
                %282 = sbr.rel target = $region54
              $region59: #{tpu_custom_call.1} parent=51 // loop_exit
                _
            $region52: #{tpu_custom_call.1} parent=43 // pred_fallthru
              _
          $region44: #{tpu_custom_call.1} parent=39 // pred_fallthru
            _
          %373 = vnop
        $region40: #{tpu_custom_call.1} parent=31 // pred_fallthru
          _
        // Predicated region
        $region78: #{tpu_custom_call.1} parent=31 // pred_check
          %p374 = pneg %p184
        $region79: #{tpu_custom_call.1} parent=31 // pred_check_branch
          %376 = sbr.rel (%p374) target = $region81
        $region80: #{tpu_custom_call.1} parent=31 // pred_region
          %p377 = scmp.lt.s32.totalorder %s24, 1
          %s378 = scalar_select %p377, %s24, 1
          %s379 = scalar_lea.vmem %s6, %s378
        $region81: #{tpu_custom_call.1} parent=31 // pred_fallthru
          _
      $region32: #{tpu_custom_call.1} parent=5 // pred_fallthru
        _
      %p380 = scmp.le.s32.totalorder 1, %s16
      %p381 = scmp.lt.s32.totalorder %s16, 5
      %p382 = pnand %p380, %p381
      %p383 = pneg %p382
      // Predicated region
      $region82: #{tpu_custom_call.1} parent=5 // pred_check
        _
      $region83: #{tpu_custom_call.1} parent=5 // pred_check_branch
        %385 = sbr.rel (%p382) target = $region85
      $region84: #{tpu_custom_call.1} parent=5 // pred_region
        %s386 = ssub.s32 %s16, 1
        %s387 = sand.u32 %s151, 1
        %s388 = sand.u32 %s151, 1
        %s389 = smul.addr %s388, 64
        %s390 = scalar_lea.vmem [#allocation3], %s389
        // Predicated region
        $region86: #{tpu_custom_call.1} parent=84 // pred_check
          %p391 = pneg %p164
        $region87: #{tpu_custom_call.1} parent=84 // pred_check_branch
          %393 = sbr.rel (%p391) target = $region89
        $region88: #{tpu_custom_call.1} parent=84 // pred_region
          _
        $region89: #{tpu_custom_call.1} parent=84 // pred_fallthru
          _
        %s394 = smul.u32 13, %s25
        %s395 = ssub.s32 25, %s394
        %p396 = scmp.lt.s32.totalorder %s395, 13
        %s397 = scalar_select %p396, %s395, 13
        %s398 = smul.u32 128, %s397
        %p399 = scmp.lt.s32.totalorder %s394, 24
        %s400 = scalar_select %p399, %s394, 24
        %s401 = smul.addr %s400, 8
        %s402 = scalar_lea.vmem %s0, %s401
        %p403 = pneg %p54
        %p404 = pneg %p51
        %p405 = pneg %p75
        %p406 = pneg %p72
        %p407 = pneg %p96
        %p408 = pneg %p93
        %p409 = pneg %p117
        %p410 = pneg %p114
        %p411 = pneg %p138
        %p412 = pneg %p135
        %s413 = sand.u32 %s151, 1
        %s414 = sand.u32 %s151, 1
        %s415 = smul.addr %s414, 64
        %s416 = scalar_lea.vmem [#allocation3], %s415
        %p417 = pneg %p164
        %p418 = pneg %p161
        %p419 = scmp.lt.s32.totalorder %s26, 1
        %s420 = scalar_select %p419, %s26, 1
        %s421 = scalar_lea.vmem %s6, %s420
        %p422 = pneg %p190
        %p423 = pneg %p187
        %p424 = pneg %p218
        %p425 = pneg %p215
        %s426 = sand.u32 %s205, 1
        %s427 = scalar_lea.sflag [#allocation5], %s426
        %s428 = sand.u32 %s205, 1
        %s429 = smul.addr %s428, 52
        %s430 = scalar_lea.vmem [#allocation4], %s429
        %s431 = smul.u32 13, %s25
        %s432 = ssub.s32 25, %s431
        %p433 = scmp.lt.s32.totalorder %s432, 13
        %s434 = scalar_select %p433, %s432, 13
        %s435 = smul.u32 128, %s434
        %p436 = scmp.lt.s32.totalorder %s431, 24
        %s437 = scalar_select %p436, %s431, 24
        %s438 = smul.addr %s437, 8
        %s439 = scalar_lea.vmem %s0, %s438
        %s440 = smul.u32 13, %s25
        %s441 = ssub.s32 25, %s440
        %p442 = scmp.lt.s32.totalorder %s441, 13
        %s443 = scalar_select %p442, %s441, 13
        %s444 = smul.u32 128, %s443
        %p445 = scmp.lt.s32.totalorder %s26, 1
        %s446 = scalar_select %p445, %s26, 1
        %s447 = scalar_lea.vmem %s6, %s446
        %s448 = smul.u32 13, %s25
        %s449 = ssub.s32 25, %s448
        %p450 = scmp.lt.s32.totalorder %s449, 13
        %s451 = scalar_select %p450, %s449, 13
        %s452 = smul.u32 64, %s451
        %p454 = scmp.eq.s32.totalorder %s26, 0
        // Predicated region
        $region90: #{tpu_custom_call.1} parent=84 // pred_check
          %p455 = pneg %p454
        $region91: #{tpu_custom_call.1} parent=84 // pred_check_branch
          %457 = sbr.rel (%p455) target = $region93
        $region92: #{tpu_custom_call.1} parent=84 // pred_region
          %v458 = vld [vmem:[%s439] sm:$0xff]
          %v459 = vld [vmem:[%s439 + $0x8] sm:$0xff]
          %v460 = vld [vmem:[%s439 + $0x10] sm:$0xff]
          %v461 = vld [vmem:[%s439 + $0x18] sm:$0xff]
          %v462 = vld [vmem:[%s439 + $0x20] sm:$0xff]
          %v463 = vld [vmem:[%s439 + $0x28] sm:$0xff]
          %v464 = vld [vmem:[%s439 + $0x30] sm:$0xff]
          %v465 = vld [vmem:[%s439 + $0x38] sm:$0xff]
          %v466 = vld [vmem:[%s439 + $0x40] sm:$0xff]
          %v467 = vld [vmem:[%s439 + $0x48] sm:$0xff]
          %v468 = vld [vmem:[%s439 + $0x50] sm:$0xff]
          %v469 = vld [vmem:[%s439 + $0x58] sm:$0xff]
          %v470 = vld [vmem:[%s439 + $0x60] sm:$0xff]
          %v471 = vpack.c.bf16 %v459, %v458
          %v472 = vpack.c.bf16 %v461, %v460
          %v473 = vpack.c.bf16 %v463, %v462
          %v474 = vpack.c.bf16 %v465, %v464
          %v475 = vpack.c.bf16 %v467, %v466
          %v476 = vpack.c.bf16 %v469, %v468
          %v477 = vpack.c.bf16 %v470, %v470
          %v478 = vld [vmem:[%s1] sm:$0xf]
          %v479 = vld [vmem:[%s2] sm:$0x1]
          %v481 = vlaneseq
          %v482 = vshrl.u32 %v481, 7
          %v483 = vsub.s32 0, %v482
          %v484 = vrot.slane %v479, %v483
          %vm486 = vcmask 64512
          %v488 = vsel %vm486, %v471, 0
          %v491 = vsel %vm486, %v472, 0
          %v494 = vsel %vm486, %v473, 0
          %v497 = vsel %vm486, %v474, 0
          %v500 = vsel %vm486, %v475, 0
          %v503 = vsel %vm486, %v476, 0
          %v506 = vsel %vm486, %v477, 0
          %vm508 = vcmask 1043456
          %v510 = vsel %vm508, %v478, 0
          %512 = vmatprep.subr.bf16.mxu0 0
          %513 = vmatpush1.bf16.msra.mxu0 %v510
          %514 = vmatprep.subr.bf16.mxu0 0
          %515 = vmatpush1.bf16.msra.mxu0 0
          %516 = vmatprep.subr.bf16.mxu0 0
          %517 = vmatpush1.bf16.msra.mxu0 0
          %518 = vmatprep.subr.bf16.mxu0 0
          %519 = vmatpush1.bf16.msra.mxu0 0
          %520 = vmatprep.subr.bf16.mxu0 0
          %521 = vmatpush1.bf16.msra.mxu0 0
          %522 = vmatprep.subr.bf16.mxu0 0
          %523 = vmatpush1.bf16.msra.mxu0 0
          %524 = vmatprep.subr.bf16.mxu0 0
          %525 = vmatpush1.bf16.msra.mxu0 0
          %526 = vmatprep.subr.bf16.mxu0 0
          %527 = vmatpush1.bf16.msra.mxu0 0
          %528 = vmatprep.subr.bf16.mxu0 0
          %529 = vmatpush1.bf16.msra.mxu0 0
          %530 = vmatprep.subr.bf16.mxu0 0
          %531 = vmatpush1.bf16.msra.mxu0 0
          %532 = vmatprep.subr.bf16.mxu0 0
          %533 = vmatpush1.bf16.msra.mxu0 0
          %534 = vmatprep.subr.bf16.mxu0 0
          %535 = vmatpush1.bf16.msra.mxu0 0
          %536 = vmatprep.subr.bf16.mxu0 0
          %537 = vmatpush1.bf16.msra.mxu0 0
          %538 = vmatprep.subr.bf16.mxu0 0
          %539 = vmatpush1.bf16.msra.mxu0 0
          %540 = vmatprep.subr.bf16.mxu0 0
          %541 = vmatpush1.bf16.msra.mxu0 0
          %542 = vmatprep.subr.bf16.mxu0 0
          %543 = vmatpush1.bf16.msra.mxu0 0
          %544 = vmatprep.mubr.bf16.mxu0 0
          %545 = vmatmul.mubr.bf16.gmra.mrb[0].mxu0 %v488
          %v546 = vpop.f32.mrb[0].mxu0
          %v547 = vadd.f32 %v484, %v546
          %v548 = vpop.f32.mrb[0].mxu0
          %v549 = vpop.f32.mrb[0].mxu0
          %v550 = vadd.f32 %v484, %v549
          %v551 = vpop.f32.mrb[0].mxu0
          %552 = vmatprep.mubr.bf16.mxu0 0
          %553 = vmatmul.mubr.bf16.gmra.mrb[0].mxu0 %v491
          %v554 = vpop.f32.mrb[0].mxu0
          %v555 = vadd.f32 %v484, %v554
          %v556 = vpop.f32.mrb[0].mxu0
          %v557 = vpop.f32.mrb[0].mxu0
          %v558 = vadd.f32 %v484, %v557
          %v559 = vpop.f32.mrb[0].mxu0
          %560 = vmatprep.mubr.bf16.mxu0 0
          %561 = vmatmul.mubr.bf16.gmra.mrb[0].mxu0 %v494
          %v562 = vpop.f32.mrb[0].mxu0
          %v563 = vadd.f32 %v484, %v562
          %v564 = vpop.f32.mrb[0].mxu0
          %v565 = vpop.f32.mrb[0].mxu0
          %v566 = vadd.f32 %v484, %v565
          %v567 = vpop.f32.mrb[0].mxu0
          %568 = vmatprep.mubr.bf16.mxu0 0
          %569 = vmatmul.mubr.bf16.gmra.mrb[0].mxu0 %v497
          %v570 = vpop.f32.mrb[0].mxu0
          %v571 = vadd.f32 %v484, %v570
          %v572 = vpop.f32.mrb[0].mxu0
          %v573 = vpop.f32.mrb[0].mxu0
          %v574 = vadd.f32 %v484, %v573
          %v575 = vpop.f32.mrb[0].mxu0
          %576 = vmatprep.mubr.bf16.mxu0 0
          %577 = vmatmul.mubr.bf16.gmra.mrb[0].mxu0 %v500
          %v578 = vpop.f32.mrb[0].mxu0
          %v579 = vadd.f32 %v484, %v578
          %v580 = vpop.f32.mrb[0].mxu0
          %v581 = vpop.f32.mrb[0].mxu0
          %v582 = vadd.f32 %v484, %v581
          %v583 = vpop.f32.mrb[0].mxu0
          %584 = vmatprep.mubr.bf16.mxu0 0
          %585 = vmatmul.mubr.bf16.gmra.mrb[0].mxu0 %v503
          %v586 = vpop.f32.mrb[0].mxu0
          %v587 = vadd.f32 %v484, %v586
          %v588 = vpop.f32.mrb[0].mxu0
          %v589 = vpop.f32.mrb[0].mxu0
          %v590 = vadd.f32 %v484, %v589
          %v591 = vpop.f32.mrb[0].mxu0
          %592 = vmatprep.mubr.bf16.mxu0 0
          %593 = vmatmul.mubr.bf16.gmra.mrb[0].mxu0 %v506
          %v594 = vpop.f32.mrb[0].mxu0
          %v595 = vadd.f32 %v484, %v594
          %v596 = vpop.f32.mrb[0].mxu0
          %v597 = vpop.f32.mrb[0].mxu0
          %v598 = vpop.f32.mrb[0].mxu0
          %599 = vdwg.mxu0
          %v600 = vtanh.pop %v547
          %v601 = vtanh.pop %v550
          %v602 = vtanh.pop %v555
          %v603 = vtanh.pop %v558
          %v604 = vtanh.pop %v563
          %v605 = vtanh.pop %v566
          %v606 = vtanh.pop %v571
          %v607 = vtanh.pop %v574
          %v608 = vtanh.pop %v579
          %v609 = vtanh.pop %v582
          %v610 = vtanh.pop %v587
          %v611 = vtanh.pop %v590
          %v612 = vtanh.pop %v595
          %v613 = vpack.c.bf16 %v601, %v600
          %v614 = vpack.c.bf16 %v603, %v602
          %v615 = vpack.c.bf16 %v605, %v604
          %v616 = vpack.c.bf16 %v607, %v606
          %v617 = vpack.c.bf16 %v609, %v608
          %v618 = vpack.c.bf16 %v611, %v610
          %v619 = vpack.c.bf16 %v612, %v612
          %v620 = vld [vmem:[%s3] sm:$0xf]
          %v621 = vld [vmem:[%s3 + $0x4] sm:$0xf]
          %v622 = vld [vmem:[%s3 + $0x8] sm:$0xf]
          %v623 = vld [vmem:[%s3 + $0xc] sm:$0xf]
          %v624 = vld [vmem:[%s3 + $0x10] sm:$0xf]
          %v625 = vld [vmem:[%s3 + $0x14] sm:$0xf]
          %v626 = vld [vmem:[%s3 + $0x18] sm:$0xf]
          %v627 = vld [vmem:[%s3 + $0x1c] sm:$0xf]
          %v628 = vld [vmem:[%s3 + $0x20] sm:$0xf]
          %v629 = vld [vmem:[%s3 + $0x24] sm:$0xf]
          %v630 = vld [vmem:[%s3 + $0x28] sm:$0xf]
          %v631 = vld [vmem:[%s3 + $0x2c] sm:$0xf]
          %v632 = vld [vmem:[%s3 + $0x30] sm:$0xf]
          %v633 = vld [vmem:[%s3 + $0x34] sm:$0xf]
          %v634 = vld [vmem:[%s3 + $0x38] sm:$0xf]
          %v635 = vld [vmem:[%s3 + $0x3c] sm:$0xf]
          %v636 = vld [vmem:[%s4] sm:$0x1]
          %v638 = vlaneseq
          %v639 = vshrl.u32 %v638, 7
          %v640 = vsub.s32 0, %v639
          %v641 = vrot.slane %v636, %v640
          %v659 = vunpack.c.l.b16 %v620
          %v660 = vunpack.c.l.b16 %v621
          %v661 = vunpack.c.l.b16 %v622
          %v662 = vunpack.c.l.b16 %v623
          %v663 = vunpack.c.l.b16 %v624
          %v664 = vunpack.c.l.b16 %v625
          %v665 = vunpack.c.l.b16 %v626
          %v666 = vunpack.c.l.b16 %v627
          %v667 = vunpack.c.l.b16 %v628
          %v668 = vunpack.c.l.b16 %v629
          %v669 = vunpack.c.l.b16 %v630
          %v670 = vunpack.c.l.b16 %v631
          %v671 = vunpack.c.l.b16 %v632
          %v672 = vunpack.c.l.b16 %v633
          %v673 = vunpack.c.l.b16 %v634
          %v674 = vunpack.c.l.b16 %v635
          %v675 = vpack.c.b16 %v660, %v659
          %v676 = vpack.c.b16 %v662, %v661
          %v677 = vpack.c.b16 %v664, %v663
          %v678 = vpack.c.b16 %v666, %v665
          %v679 = vpack.c.b16 %v668, %v667
          %v680 = vpack.c.b16 %v670, %v669
          %v681 = vpack.c.b16 %v672, %v671
          %v682 = vpack.c.b16 %v674, %v673
          %691 = vmatprep.subr.bf16.mxu0 0
          %692 = vmatpush1.bf16.msra.mxu0 %v675
          %693 = vmatprep.subr.bf16.mxu0 0
          %694 = vmatpush1.bf16.msra.mxu0 %v676
          %695 = vmatprep.subr.bf16.mxu0 0
          %696 = vmatpush1.bf16.msra.mxu0 %v677
          %697 = vmatprep.subr.bf16.mxu0 0
          %698 = vmatpush1.bf16.msra.mxu0 %v678
          %699 = vmatprep.subr.bf16.mxu0 0
          %700 = vmatpush1.bf16.msra.mxu0 %v679
          %701 = vmatprep.subr.bf16.mxu0 0
          %702 = vmatpush1.bf16.msra.mxu0 %v680
          %703 = vmatprep.subr.bf16.mxu0 0
          %704 = vmatpush1.bf16.msra.mxu0 %v681
          %705 = vmatprep.subr.bf16.mxu0 0
          %706 = vmatpush1.bf16.msra.mxu0 %v682
          %707 = vmatprep.subr.bf16.mxu0 0
          %708 = vmatpush1.bf16.msra.mxu0 0
          %709 = vmatprep.subr.bf16.mxu0 0
          %710 = vmatpush1.bf16.msra.mxu0 0
          %711 = vmatprep.subr.bf16.mxu0 0
          %712 = vmatpush1.bf16.msra.mxu0 0
          %713 = vmatprep.subr.bf16.mxu0 0
          %714 = vmatpush1.bf16.msra.mxu0 0
          %715 = vmatprep.subr.bf16.mxu0 0
          %716 = vmatpush1.bf16.msra.mxu0 0
          %717 = vmatprep.subr.bf16.mxu0 0
          %718 = vmatpush1.bf16.msra.mxu0 0
          %719 = vmatprep.subr.bf16.mxu0 0
          %720 = vmatpush1.bf16.msra.mxu0 0
          %721 = vmatprep.subr.bf16.mxu0 0
          %722 = vmatpush1.bf16.msra.mxu0 0
          %723 = vmatprep.mubr.bf16.mxu0 0
          %724 = vmatmul.mubr.bf16.gmra.mrb[0].mxu0 %v613
          %v725 = vpop.f32.mrb[0].mxu0
          %v726 = vadd.f32 %v641, %v725
          %v727 = vpop.f32.mrb[0].mxu0
          %v728 = vpop.f32.mrb[0].mxu0
          %v729 = vadd.f32 %v641, %v728
          %v730 = vpop.f32.mrb[0].mxu0
          %731 = vmatprep.mubr.bf16.mxu0 0
          %732 = vmatmul.mubr.bf16.gmra.mrb[0].mxu0 %v614
          %v733 = vpop.f32.mrb[0].mxu0
          %v734 = vadd.f32 %v641, %v733
          %v735 = vpop.f32.mrb[0].mxu0
          %v736 = vpop.f32.mrb[0].mxu0
          %v737 = vadd.f32 %v641, %v736
          %v738 = vpop.f32.mrb[0].mxu0
          %739 = vmatprep.mubr.bf16.mxu0 0
          %740 = vmatmul.mubr.bf16.gmra.mrb[0].mxu0 %v615
          %v741 = vpop.f32.mrb[0].mxu0
          %v742 = vadd.f32 %v641, %v741
          %v743 = vpop.f32.mrb[0].mxu0
          %v744 = vpop.f32.mrb[0].mxu0
          %v745 = vadd.f32 %v641, %v744
          %v746 = vpop.f32.mrb[0].mxu0
          %747 = vmatprep.mubr.bf16.mxu0 0
          %748 = vmatmul.mubr.bf16.gmra.mrb[0].mxu0 %v616
          %v749 = vpop.f32.mrb[0].mxu0
          %v750 = vadd.f32 %v641, %v749
          %v751 = vpop.f32.mrb[0].mxu0
          %v752 = vpop.f32.mrb[0].mxu0
          %v753 = vadd.f32 %v641, %v752
          %v754 = vpop.f32.mrb[0].mxu0
          %755 = vmatprep.mubr.bf16.mxu0 0
          %756 = vmatmul.mubr.bf16.gmra.mrb[0].mxu0 %v617
          %v757 = vpop.f32.mrb[0].mxu0
          %v758 = vadd.f32 %v641, %v757
          %v759 = vpop.f32.mrb[0].mxu0
          %v760 = vpop.f32.mrb[0].mxu0
          %v761 = vadd.f32 %v641, %v760
          %v762 = vpop.f32.mrb[0].mxu0
          %763 = vmatprep.mubr.bf16.mxu0 0
          %764 = vmatmul.mubr.bf16.gmra.mrb[0].mxu0 %v618
          %v765 = vpop.f32.mrb[0].mxu0
          %v766 = vadd.f32 %v641, %v765
          %v767 = vpop.f32.mrb[0].mxu0
          %v768 = vpop.f32.mrb[0].mxu0
          %v769 = vadd.f32 %v641, %v768
          %v770 = vpop.f32.mrb[0].mxu0
          %771 = vmatprep.mubr.bf16.mxu0 0
          %772 = vmatmul.mubr.bf16.gmra.mrb[0].mxu0 %v619
          %v773 = vpop.f32.mrb[0].mxu0
          %v774 = vadd.f32 %v641, %v773
          %v775 = vpop.f32.mrb[0].mxu0
          %v776 = vpop.f32.mrb[0].mxu0
          %v777 = vpop.f32.mrb[0].mxu0
          %778 = vdwg.mxu0
          %v779 = vtanh.pop %v726
          %v780 = vtanh.pop %v729
          %v781 = vtanh.pop %v734
          %v782 = vtanh.pop %v737
          %v783 = vtanh.pop %v742
          %v784 = vtanh.pop %v745
          %v785 = vtanh.pop %v750
          %v786 = vtanh.pop %v753
          %v787 = vtanh.pop %v758
          %v788 = vtanh.pop %v761
          %v789 = vtanh.pop %v766
          %v790 = vtanh.pop %v769
          %v791 = vtanh.pop %v774
          %v792 = vpack.c.bf16 %v780, %v779
          %v793 = vpack.c.bf16 %v782, %v781
          %v794 = vpack.c.bf16 %v784, %v783
          %v795 = vpack.c.bf16 %v786, %v785
          %v796 = vpack.c.bf16 %v788, %v787
          %v797 = vpack.c.bf16 %v790, %v789
          %v798 = vpack.c.bf16 %v791, %v791
          %v806 = vunpack.c.l.b16 %v792
          %v807 = vunpack.c.h.b16 %v792
          %v808 = vunpack.c.l.b16 %v793
          %v809 = vunpack.c.h.b16 %v793
          %v810 = vunpack.c.l.b16 %v794
          %v811 = vunpack.c.h.b16 %v794
          %v812 = vunpack.c.l.b16 %v795
          %v813 = vunpack.c.h.b16 %v795
          %v814 = vunpack.c.l.b16 %v796
          %v815 = vunpack.c.h.b16 %v796
          %v816 = vunpack.c.l.b16 %v797
          %v817 = vunpack.c.h.b16 %v797
          %v818 = vunpack.c.l.b16 %v798
          %v819 = vpack.c.b16 %v806, %v806
          %v820 = vpack.c.b16 %v807, %v807
          %v821 = vpack.c.b16 %v808, %v808
          %v822 = vpack.c.b16 %v809, %v809
          %v823 = vpack.c.b16 %v810, %v810
          %v824 = vpack.c.b16 %v811, %v811
          %v825 = vpack.c.b16 %v812, %v812
          %v826 = vpack.c.b16 %v813, %v813
          %v827 = vpack.c.b16 %v814, %v814
          %v828 = vpack.c.b16 %v815, %v815
          %v829 = vpack.c.b16 %v816, %v816
          %v830 = vpack.c.b16 %v817, %v817
          %v831 = vpack.c.b16 %v818, %v818
          %845 = vst [vmem:[#allocation2] sm:$0xf] %v819
          %846 = vst [vmem:[#allocation2 + $0x4] sm:$0xf] %v820
          %847 = vst [vmem:[#allocation2 + $0x8] sm:$0xf] %v821
          %848 = vst [vmem:[#allocation2 + $0xc] sm:$0xf] %v822
          %849 = vst [vmem:[#allocation2 + $0x10] sm:$0xf] %v823
          %850 = vst [vmem:[#allocation2 + $0x14] sm:$0xf] %v824
          %851 = vst [vmem:[#allocation2 + $0x18] sm:$0xf] %v825
          %852 = vst [vmem:[#allocation2 + $0x1c] sm:$0xf] %v826
          %853 = vst [vmem:[#allocation2 + $0x20] sm:$0xf] %v827
          %854 = vst [vmem:[#allocation2 + $0x24] sm:$0xf] %v828
          %855 = vst [vmem:[#allocation2 + $0x28] sm:$0xf] %v829
          %856 = vst [vmem:[#allocation2 + $0x2c] sm:$0xf] %v830
          %857 = vst [vmem:[#allocation2 + $0x30] sm:$0xf] %v831
        $region93: #{tpu_custom_call.1} parent=84 // pred_fallthru
          _
        %v858 = vld [vmem:[#allocation2] sm:$0xf]
        %v859 = vld [vmem:[#allocation2 + $0x4] sm:$0xf]
        %v860 = vld [vmem:[#allocation2 + $0x8] sm:$0xf]
        %v861 = vld [vmem:[#allocation2 + $0xc] sm:$0xf]
        %v862 = vld [vmem:[#allocation2 + $0x10] sm:$0xf]
        %v863 = vld [vmem:[#allocation2 + $0x14] sm:$0xf]
        %v864 = vld [vmem:[#allocation2 + $0x18] sm:$0xf]
        %v865 = vld [vmem:[#allocation2 + $0x1c] sm:$0xf]
        %v866 = vld [vmem:[#allocation2 + $0x20] sm:$0xf]
        %v867 = vld [vmem:[#allocation2 + $0x24] sm:$0xf]
        %v868 = vld [vmem:[#allocation2 + $0x28] sm:$0xf]
        %v869 = vld [vmem:[#allocation2 + $0x2c] sm:$0xf]
        %v870 = vld [vmem:[#allocation2 + $0x30] sm:$0xf]
        %v871 = vld [vmem:[%s390] sm:$0xf]
        %v872 = vld [vmem:[%s390 + $0x4] sm:$0xf]
        %v873 = vld [vmem:[%s390 + $0x8] sm:$0xf]
        %v874 = vld [vmem:[%s390 + $0xc] sm:$0xf]
        %v875 = vld [vmem:[%s390 + $0x10] sm:$0xf]
        %v876 = vld [vmem:[%s390 + $0x14] sm:$0xf]
        %v877 = vld [vmem:[%s390 + $0x18] sm:$0xf]
        %v878 = vld [vmem:[%s390 + $0x1c] sm:$0xf]
        %v879 = vld [vmem:[%s390 + $0x20] sm:$0xf]
        %v880 = vld [vmem:[%s390 + $0x24] sm:$0xf]
        %v881 = vld [vmem:[%s390 + $0x28] sm:$0xf]
        %v882 = vld [vmem:[%s390 + $0x2c] sm:$0xf]
        %v883 = vld [vmem:[%s390 + $0x30] sm:$0xf]
        %v884 = vld [vmem:[%s390 + $0x34] sm:$0xf]
        %v885 = vld [vmem:[%s390 + $0x38] sm:$0xf]
        %v886 = vld [vmem:[%s390 + $0x3c] sm:$0xf]
        %v887 = vld [vmem:[%s447] sm:$0x1]
        %v889 = vlaneseq
        %v890 = vshrl.u32 %v889, 7
        %v891 = vsub.s32 0, %v890
        %v892 = vrot.slane %v887, %v891
        %v907 = vunpack.c.l.b16 %v858
        %v908 = vunpack.c.l.b16 %v859
        %v909 = vunpack.c.l.b16 %v860
        %v910 = vunpack.c.l.b16 %v861
        %v911 = vunpack.c.l.b16 %v862
        %v912 = vunpack.c.l.b16 %v863
        %v913 = vunpack.c.l.b16 %v864
        %v914 = vunpack.c.l.b16 %v865
        %v915 = vunpack.c.l.b16 %v866
        %v916 = vunpack.c.l.b16 %v867
        %v917 = vunpack.c.l.b16 %v868
        %v918 = vunpack.c.l.b16 %v869
        %v919 = vunpack.c.l.b16 %v870
        %v920 = vpack.c.b16 %v908, %v907
        %v921 = vpack.c.b16 %v910, %v909
        %v922 = vpack.c.b16 %v912, %v911
        %v923 = vpack.c.b16 %v914, %v913
        %v924 = vpack.c.b16 %v916, %v915
        %v925 = vpack.c.b16 %v918, %v917
        %v926 = vpack.c.b16 %v919, %v919
        %v950 = vunpack.c.l.b16 %v871
        %v951 = vunpack.c.l.b16 %v872
        %v952 = vunpack.c.l.b16 %v873
        %v953 = vunpack.c.l.b16 %v874
        %v954 = vunpack.c.l.b16 %v875
        %v955 = vunpack.c.l.b16 %v876
        %v956 = vunpack.c.l.b16 %v877
        %v957 = vunpack.c.l.b16 %v878
        %v958 = vunpack.c.l.b16 %v879
        %v959 = vunpack.c.l.b16 %v880
        %v960 = vunpack.c.l.b16 %v881
        %v961 = vunpack.c.l.b16 %v882
        %v962 = vunpack.c.l.b16 %v883
        %v963 = vunpack.c.l.b16 %v884
        %v964 = vunpack.c.l.b16 %v885
        %v965 = vunpack.c.l.b16 %v886
        %v966 = vpack.c.b16 %v951, %v950
        %v967 = vpack.c.b16 %v953, %v952
        %v968 = vpack.c.b16 %v955, %v954
        %v969 = vpack.c.b16 %v957, %v956
        %v970 = vpack.c.b16 %v959, %v958
        %v971 = vpack.c.b16 %v961, %v960
        %v972 = vpack.c.b16 %v963, %v962
        %v973 = vpack.c.b16 %v965, %v964
        %982 = vmatprep.subr.bf16.mxu0 0
        %983 = vmatpush1.bf16.msra.mxu0 %v966
        %984 = vmatprep.subr.bf16.mxu0 0
        %985 = vmatpush1.bf16.msra.mxu0 %v967
        %986 = vmatprep.subr.bf16.mxu0 0
        %987 = vmatpush1.bf16.msra.mxu0 %v968
        %988 = vmatprep.subr.bf16.mxu0 0
        %989 = vmatpush1.bf16.msra.mxu0 %v969
        %990 = vmatprep.subr.bf16.mxu0 0
        %991 = vmatpush1.bf16.msra.mxu0 %v970
        %992 = vmatprep.subr.bf16.mxu0 0
        %993 = vmatpush1.bf16.msra.mxu0 %v971
        %994 = vmatprep.subr.bf16.mxu0 0
        %995 = vmatpush1.bf16.msra.mxu0 %v972
        %996 = vmatprep.subr.bf16.mxu0 0
        %997 = vmatpush1.bf16.msra.mxu0 %v973
        %998 = vmatprep.subr.bf16.mxu0 0
        %999 = vmatpush1.bf16.msra.mxu0 0
        %1000 = vmatprep.subr.bf16.mxu0 0
        %1001 = vmatpush1.bf16.msra.mxu0 0
        %1002 = vmatprep.subr.bf16.mxu0 0
        %1003 = vmatpush1.bf16.msra.mxu0 0
        %1004 = vmatprep.subr.bf16.mxu0 0
        %1005 = vmatpush1.bf16.msra.mxu0 0
        %1006 = vmatprep.subr.bf16.mxu0 0
        %1007 = vmatpush1.bf16.msra.mxu0 0
        %1008 = vmatprep.subr.bf16.mxu0 0
        %1009 = vmatpush1.bf16.msra.mxu0 0
        %1010 = vmatprep.subr.bf16.mxu0 0
        %1011 = vmatpush1.bf16.msra.mxu0 0
        %1012 = vmatprep.subr.bf16.mxu0 0
        %1013 = vmatpush1.bf16.msra.mxu0 0
        %1014 = vmatprep.mubr.bf16.mxu0 0
        %1015 = vmatmul.mubr.bf16.gmra.mrb[0].mxu0 %v920
        %v1016 = vpop.f32.mrb[0].mxu0
        %v1017 = vadd.f32 %v892, %v1016
        %v1018 = vpop.f32.mrb[0].mxu0
        %v1019 = vpop.f32.mrb[0].mxu0
        %v1020 = vadd.f32 %v892, %v1019
        %v1021 = vpop.f32.mrb[0].mxu0
        %1022 = vmatprep.mubr.bf16.mxu0 0
        %1023 = vmatmul.mubr.bf16.gmra.mrb[0].mxu0 %v921
        %v1024 = vpop.f32.mrb[0].mxu0
        %v1025 = vadd.f32 %v892, %v1024
        %v1026 = vpop.f32.mrb[0].mxu0
        %v1027 = vpop.f32.mrb[0].mxu0
        %v1028 = vadd.f32 %v892, %v1027
        %v1029 = vpop.f32.mrb[0].mxu0
        %1030 = vmatprep.mubr.bf16.mxu0 0
        %1031 = vmatmul.mubr.bf16.gmra.mrb[0].mxu0 %v922
        %v1032 = vpop.f32.mrb[0].mxu0
        %v1033 = vadd.f32 %v892, %v1032
        %v1034 = vpop.f32.mrb[0].mxu0
        %v1035 = vpop.f32.mrb[0].mxu0
        %v1036 = vadd.f32 %v892, %v1035
        %v1037 = vpop.f32.mrb[0].mxu0
        %1038 = vmatprep.mubr.bf16.mxu0 0
        %1039 = vmatmul.mubr.bf16.gmra.mrb[0].mxu0 %v923
        %v1040 = vpop.f32.mrb[0].mxu0
        %v1041 = vadd.f32 %v892, %v1040
        %v1042 = vpop.f32.mrb[0].mxu0
        %v1043 = vpop.f32.mrb[0].mxu0
        %v1044 = vadd.f32 %v892, %v1043
        %v1045 = vpop.f32.mrb[0].mxu0
        %1046 = vmatprep.mubr.bf16.mxu0 0
        %1047 = vmatmul.mubr.bf16.gmra.mrb[0].mxu0 %v924
        %v1048 = vpop.f32.mrb[0].mxu0
        %v1049 = vadd.f32 %v892, %v1048
        %v1050 = vpop.f32.mrb[0].mxu0
        %v1051 = vpop.f32.mrb[0].mxu0
        %v1052 = vadd.f32 %v892, %v1051
        %v1053 = vpop.f32.mrb[0].mxu0
        %1054 = vmatprep.mubr.bf16.mxu0 0
        %1055 = vmatmul.mubr.bf16.gmra.mrb[0].mxu0 %v925
        %v1056 = vpop.f32.mrb[0].mxu0
        %v1057 = vadd.f32 %v892, %v1056
        %v1058 = vpop.f32.mrb[0].mxu0
        %v1059 = vpop.f32.mrb[0].mxu0
        %v1060 = vadd.f32 %v892, %v1059
        %v1061 = vpop.f32.mrb[0].mxu0
        %1062 = vmatprep.mubr.bf16.mxu0 0
        %1063 = vmatmul.mubr.bf16.gmra.mrb[0].mxu0 %v926
        %v1064 = vpop.f32.mrb[0].mxu0
        %v1065 = vadd.f32 %v892, %v1064
        %v1066 = vpop.f32.mrb[0].mxu0
        %v1067 = vpop.f32.mrb[0].mxu0
        %v1068 = vpop.f32.mrb[0].mxu0
        %1069 = vdwg.mxu0
        %v1070 = vxor.u32 %v1017, 2147483648
        %v1071 = vxor.u32 %v1020, 2147483648
        %v1072 = vxor.u32 %v1025, 2147483648
        %v1073 = vxor.u32 %v1028, 2147483648
        %v1074 = vxor.u32 %v1033, 2147483648
        %v1075 = vxor.u32 %v1036, 2147483648
        %v1076 = vxor.u32 %v1041, 2147483648
        %v1077 = vxor.u32 %v1044, 2147483648
        %v1078 = vxor.u32 %v1049, 2147483648
        %v1079 = vxor.u32 %v1052, 2147483648
        %v1080 = vxor.u32 %v1057, 2147483648
        %v1081 = vxor.u32 %v1060, 2147483648
        %v1082 = vxor.u32 %v1065, 2147483648
        %v1083 = vmul.f32 %v1070, 1.442695
        %v1084 = vpow.pop %v1083
        %v1085 = vmul.f32 %v1071, 1.442695
        %v1086 = vpow.pop %v1085
        %v1087 = vmul.f32 %v1072, 1.442695
        %v1088 = vpow.pop %v1087
        %v1089 = vmul.f32 %v1073, 1.442695
        %v1090 = vpow.pop %v1089
        %v1091 = vmul.f32 %v1074, 1.442695
        %v1092 = vpow.pop %v1091
        %v1093 = vmul.f32 %v1075, 1.442695
        %v1094 = vpow.pop %v1093
        %v1095 = vmul.f32 %v1076, 1.442695
        %v1096 = vpow.pop %v1095
        %v1097 = vmul.f32 %v1077, 1.442695
        %v1098 = vpow.pop %v1097
        %v1099 = vmul.f32 %v1078, 1.442695
        %v1100 = vpow.pop %v1099
        %v1101 = vmul.f32 %v1079, 1.442695
        %v1102 = vpow.pop %v1101
        %v1103 = vmul.f32 %v1080, 1.442695
        %v1104 = vpow.pop %v1103
        %v1105 = vmul.f32 %v1081, 1.442695
        %v1106 = vpow.pop %v1105
        %v1107 = vmul.f32 %v1082, 1.442695
        %v1108 = vpow.pop %v1107
        %v1109 = vadd.f32 %v1084, 1.0
        %v1110 = vadd.f32 %v1086, 1.0
        %v1111 = vadd.f32 %v1088, 1.0
        %v1112 = vadd.f32 %v1090, 1.0
        %v1113 = vadd.f32 %v1092, 1.0
        %v1114 = vadd.f32 %v1094, 1.0
        %v1115 = vadd.f32 %v1096, 1.0
        %v1116 = vadd.f32 %v1098, 1.0
        %v1117 = vadd.f32 %v1100, 1.0
        %v1118 = vadd.f32 %v1102, 1.0
        %v1119 = vadd.f32 %v1104, 1.0
        %v1120 = vadd.f32 %v1106, 1.0
        %v1121 = vadd.f32 %v1108, 1.0
        %v1122 = vrcp.pop %v1109
        %v1123 = vmul.f32 1.0, %v1122
        %v1124 = vrcp.pop %v1110
        %v1125 = vmul.f32 1.0, %v1124
        %v1126 = vrcp.pop %v1111
        %v1127 = vmul.f32 1.0, %v1126
        %v1128 = vrcp.pop %v1112
        %v1129 = vmul.f32 1.0, %v1128
        %v1130 = vrcp.pop %v1113
        %v1131 = vmul.f32 1.0, %v1130
        %v1132 = vrcp.pop %v1114
        %v1133 = vmul.f32 1.0, %v1132
        %v1134 = vrcp.pop %v1115
        %v1135 = vmul.f32 1.0, %v1134
        %v1136 = vrcp.pop %v1116
        %v1137 = vmul.f32 1.0, %v1136
        %v1138 = vrcp.pop %v1117
        %v1139 = vmul.f32 1.0, %v1138
        %v1140 = vrcp.pop %v1118
        %v1141 = vmul.f32 1.0, %v1140
        %v1142 = vrcp.pop %v1119
        %v1143 = vmul.f32 1.0, %v1142
        %v1144 = vrcp.pop %v1120
        %v1145 = vmul.f32 1.0, %v1144
        %v1146 = vrcp.pop %v1121
        %v1147 = vmul.f32 1.0, %v1146
        %v1148 = vpack.c.bf16 %v1125, %v1123
        %v1149 = vpack.c.bf16 %v1129, %v1127
        %v1150 = vpack.c.bf16 %v1133, %v1131
        %v1151 = vpack.c.bf16 %v1137, %v1135
        %v1152 = vpack.c.bf16 %v1141, %v1139
        %v1153 = vpack.c.bf16 %v1145, %v1143
        %v1154 = vpack.c.bf16 %v1147, %v1147
        %v1162 = vunpack.c.l.b16 %v1148
        %v1163 = vunpack.c.h.b16 %v1148
        %v1164 = vunpack.c.l.b16 %v1149
        %v1165 = vunpack.c.h.b16 %v1149
        %v1166 = vunpack.c.l.b16 %v1150
        %v1167 = vunpack.c.h.b16 %v1150
        %v1168 = vunpack.c.l.b16 %v1151
        %v1169 = vunpack.c.h.b16 %v1151
        %v1170 = vunpack.c.l.b16 %v1152
        %v1171 = vunpack.c.h.b16 %v1152
        %v1172 = vunpack.c.l.b16 %v1153
        %v1173 = vunpack.c.h.b16 %v1153
        %v1174 = vunpack.c.l.b16 %v1154
        %v1175 = vpack.c.b16 %v1162, %v1162
        %v1176 = vpack.c.b16 %v1163, %v1163
        %v1177 = vpack.c.b16 %v1164, %v1164
        %v1178 = vpack.c.b16 %v1165, %v1165
        %v1179 = vpack.c.b16 %v1166, %v1166
        %v1180 = vpack.c.b16 %v1167, %v1167
        %v1181 = vpack.c.b16 %v1168, %v1168
        %v1182 = vpack.c.b16 %v1169, %v1169
        %v1183 = vpack.c.b16 %v1170, %v1170
        %v1184 = vpack.c.b16 %v1171, %v1171
        %v1185 = vpack.c.b16 %v1172, %v1172
        %v1186 = vpack.c.b16 %v1173, %v1173
        %v1187 = vpack.c.b16 %v1174, %v1174
        %1201 = vst [vmem:[%s430] sm:$0xf] %v1175
        %1202 = vst [vmem:[%s430 + $0x4] sm:$0xf] %v1176
        %1203 = vst [vmem:[%s430 + $0x8] sm:$0xf] %v1177
        %1204 = vst [vmem:[%s430 + $0xc] sm:$0xf] %v1178
        %1205 = vst [vmem:[%s430 + $0x10] sm:$0xf] %v1179
        %1206 = vst [vmem:[%s430 + $0x14] sm:$0xf] %v1180
        %1207 = vst [vmem:[%s430 + $0x18] sm:$0xf] %v1181
        %1208 = vst [vmem:[%s430 + $0x1c] sm:$0xf] %v1182
        %1209 = vst [vmem:[%s430 + $0x20] sm:$0xf] %v1183
        %1210 = vst [vmem:[%s430 + $0x24] sm:$0xf] %v1184
        %1211 = vst [vmem:[%s430 + $0x28] sm:$0xf] %v1185
        %1212 = vst [vmem:[%s430 + $0x2c] sm:$0xf] %v1186
        %1213 = vst [vmem:[%s430 + $0x30] sm:$0xf] %v1187
        %s1214 = sand.u32 %s205, 1
        %s1215 = scalar_lea.sflag [#allocation5], %s1214
        %s1216 = sand.u32 %s205, 1
        %s1217 = smul.addr %s1216, 52
        %s1218 = scalar_lea.vmem [#allocation4], %s1217
        // Predicated region
        $region94: #{tpu_custom_call.1} parent=84 // pred_check
          %p1219 = pneg %p215
        $region95: #{tpu_custom_call.1} parent=84 // pred_check_branch
          %1221 = sbr.rel (%p1219) target = $region97
        $region96: #{tpu_custom_call.1} parent=84 // pred_region
          %s1222 = smul.u32 13, %s25
          %s1223 = ssub.s32 25, %s1222
          %p1224 = scmp.lt.s32.totalorder %s1223, 13
          %s1225 = scalar_select %p1224, %s1223, 13
          %s1226 = smul.u32 64, %s1225
          %s1228 = ssub.s32 832, %s1226
          %1229 = vsyncadd %s1215, %s1228
          %p1230 = scmp.ne.s32.totalorder 0, %s1226
          %s1231 = smul.addr %s1222, 2
          %s1232 = sadd.s32 %s26, %s1231
          %s1233 = smul.addr %s1232, 64
          %s1234 = scalar_lea.hbm %s7, %s1233
          %s1235 = smul.u32 4, %s1225
          %s1236 = sshll.u32 %s1218, 4
          %s1237 = int_to_ptr.vmem [resolvable:$true] %s1236
          %s1238 = sshll.u32 %s1235, 4
          %1242 = dma.vmem_to_hbm [thread:$0]  (%p1230), %s1237, %s1238, %s1234, %s1215, 64, 128, 4
        $region97: #{tpu_custom_call.1} parent=84 // pred_fallthru
          _
      $region85: #{tpu_custom_call.1} parent=5 // pred_fallthru
        _
      %p1243 = scmp.le.s32.totalorder 2, %s16
      // Predicated region
      $region98: #{tpu_custom_call.1} parent=5 // pred_check
        %p1244 = pneg %p1243
      $region99: #{tpu_custom_call.1} parent=5 // pred_check_branch
        %1246 = sbr.rel (%p1244) target = $region101
      $region100: #{tpu_custom_call.1} parent=5 // pred_region
        %s1247 = ssub.s32 %s16, 2
        // Predicated region
        $region102: #{tpu_custom_call.1} parent=100 // pred_check
          %p1248 = pneg %p221
        $region103: #{tpu_custom_call.1} parent=100 // pred_check_branch
          %1250 = sbr.rel (%p1248) target = $region105
        $region104: #{tpu_custom_call.1} parent=100 // pred_region
          %s1251 = sand.u32 %s206, 1
          %s1252 = scalar_lea.sflag [#allocation5], %s1251
          %s1253 = sand.u32 %s206, 1
          %s1254 = smul.addr %s1253, 52
          %s1255 = scalar_lea.vmem [#allocation4], %s1254
          %1256 = dma.done %s1252, 832
        $region105: #{tpu_custom_call.1} parent=100 // pred_fallthru
          _
      $region101: #{tpu_custom_call.1} parent=5 // pred_fallthru
        _
    $region6: #{tpu_custom_call.1} parent=1 // loop_footer
      %s20 = sadd.s32 1, %s16
    $region7: #{tpu_custom_call.1} parent=1 // loop_footer_branch
      %15 = sbr.rel target = $region3
    $region8: #{tpu_custom_call.1} parent=1 // loop_exit
      _
    %1257 = vsyncpa [#allocation5], 1
    %s1258 = scalar_lea.sflag [#allocation5], 1
    %1259 = vsyncpa %s1258, 1

// kernel: tpu_custom_call.1
$region0: #{tpu_custom_call.1}
  #allocation0 [shape = 'u32[]', space=smem, size = 0x4, offset = 0x4, fixed_abs, tag = 'smem constant byte address 0x4 - core index']
  #allocation1 [shape = 'u32[144,128]{1,0:T(1,128)}', space=vmem, size = 0x12000, scoped, tag = 'internal scratch']
  #allocation2 [shape = 'bf16[104,128]{1,0:T(8,128)(2,1)}', space=vmem, size = 0x6800, scoped, tag = 'scratch operand']
  %s0 = inlined_call_operand.vmem [shape: f32[200,8], index: 0, kind: input, shape index: {}]
  %s1 = inlined_call_operand.vmem [shape: bf16[8,128], index: 1, kind: input, shape index: {}]
  %s2 = inlined_call_operand.vmem [shape: f32[1,128], index: 2, kind: input, shape index: {}]
  %s3 = inlined_call_operand.vmem [shape: bf16[128,128], index: 3, kind: input, shape index: {}]
  %s4 = inlined_call_operand.vmem [shape: f32[1,128], index: 4, kind: input, shape index: {}]
  %s5 = inlined_call_operand.vmem [shape: bf16[128,256], index: 5, kind: input, shape index: {}]
  %s6 = inlined_call_operand.vmem [shape: f32[1,256], index: 6, kind: input, shape index: {}]
  %s7 = inlined_call_operand.hbm [shape: bf16[200,256], index: 7, kind: output, shape index: {}]
  %s8 = sld [smem:[#allocation0]]
  $region106: #{tpu_custom_call.1} parent=0
    _
  %s10 = ssub.s32 1, %s8
  %s11 = scalar_select 0, %s10, %s8
  $region1: #{tpu_custom_call.1} parent=0
    #allocation3 [shape = 'u8[65536]{0}', space=vmem, size = 0x10000, scoped, tag = 'input window, operand 5']
    #allocation4 [shape = 'u8[53248]{0}', space=vmem, size = 0xd000, scoped, tag = 'output window, operand 0']
    #allocation5 [shape = 's32[2]{0}', space=sflag, size = 0x8, scoped, tag = 'scoped memory for tpu_custom_call.1']
    %12 = vsyncpa [#allocation5], 0
    %s13 = scalar_lea.sflag [#allocation5], 1
    %14 = vsyncpa %s13, 0
    loop: start=0, step=1, limit=6
    $region2: #{tpu_custom_call.1} parent=1 // loop_pre_header
      _
    $region3: #{tpu_custom_call.1} parent=1 // loop_header
      %s16 = sphi 0, %s20
      %p17 = scmp.ge.s32.totalorder %s16, 6
      %s23 = sphi 0, %s35
      %s24 = sphi 0, %s31
      %s25 = sphi 0, %s23
      %s26 = sphi 0, %s24
      %s27 = sphi 0, %s25
      %s28 = sphi 0, %s26
      %s38 = sphi 0, %s40
      %s41 = sphi 0, %s38
      %s42 = sphi 0, %s41
      %s58 = sphi 0, %s42
      %s62 = sphi 0, %s62
      %s64 = sphi 0, %s62
      %s65 = sphi 0, %s64
      %s79 = sphi 0, %s65
      %s83 = sphi 0, %s83
      %s85 = sphi 0, %s83
      %s86 = sphi 0, %s85
      %s100 = sphi 0, %s86
      %s104 = sphi 0, %s104
      %s106 = sphi 0, %s104
      %s107 = sphi 0, %s106
      %s121 = sphi 0, %s107
      %s125 = sphi 0, %s125
      %s127 = sphi 0, %s125
      %s128 = sphi 0, %s127
      %s142 = sphi 0, %s128
      %s148 = sphi 0, %s150
      %s151 = sphi 0, %s148
      %s152 = sphi 0, %s151
      %s168 = sphi 0, %s152
      %s174 = sphi 0, %s176
      %s177 = sphi 0, %s174
      %s178 = sphi 0, %s177
      %s194 = sphi 0, %s178
      %s202 = sphi 0, %s204
      %s205 = sphi 0, %s202
      %s206 = sphi 0, %s205
      %s222 = sphi 0, %s206
    $region4: #{tpu_custom_call.1} parent=1 // loop_header_branch
      %19 = sbr.rel (%p17) target = $region8
    $region5: #{tpu_custom_call.1} parent=1 // loop_body
      %s21 = ssub.s32 %s16, 1
      %s22 = ssub.s32 %s16, 2
      %s29 = sadd.s32 1, %s24
      %p30 = scmp.ge.s32.totalorder %s29, 2
      %s31 = scalar_select %p30, 0, %s29
      %s32 = sadd.s32 1, %s23
      %s33 = scalar_select %p30, %s32, %s23
      %p34 = scmp.ge.s32.totalorder %s33, 2
      %s35 = scalar_select %p34, 0, %s33
      %s36 = ssub.s32 %s23, %s35
      %p37 = scmp.eq.s32.totalorder %s36, 0
      %s39 = sadd.s32 %s38, 1
      %s40 = scalar_select %p37, %s38, %s39
      %p43 = pneg %p37
      %p44 = scmp.eq.s32.totalorder %s16, 3
      %p45 = por %p43, %p44
      %p46 = scmp.ne.s32.totalorder %s38, %s41
      %p47 = scmp.eq.s32.totalorder %s16, 0
      %p48 = por %p46, %p47
      %p49 = scmp.ne.s32.totalorder %s38, %s41
      %p50 = scmp.eq.s32.totalorder %s21, 3
      %p51 = por %p49, %p50
      %p52 = scmp.ne.s32.totalorder %s41, %s42
      %p53 = scmp.eq.s32.totalorder %s21, 0
      %p54 = por %p52, %p53
      %p55 = scmp.ne.s32.totalorder %s41, %s42
      %p56 = scmp.eq.s32.totalorder %s22, 3
      %p57 = por %p55, %p56
      %p59 = scmp.ne.s32.totalorder %s42, %s58
      %p60 = scmp.eq.s32.totalorder %s22, 0
      %p61 = por %p59, %p60
      %s63 = sadd.s32 %s62, 1
      %p66 = scmp.eq.s32.totalorder %s16, 3
      %p67 = scmp.ne.s32.totalorder %s62, %s64
      %p68 = scmp.eq.s32.totalorder %s16, 0
      %p69 = por %p67, %p68
      %p70 = scmp.ne.s32.totalorder %s62, %s64
      %p71 = scmp.eq.s32.totalorder %s21, 3
      %p72 = por %p70, %p71
      %p73 = scmp.ne.s32.totalorder %s64, %s65
      %p74 = scmp.eq.s32.totalorder %s21, 0
      %p75 = por %p73, %p74
      %p76 = scmp.ne.s32.totalorder %s64, %s65
      %p77 = scmp.eq.s32.totalorder %s22, 3
      %p78 = por %p76, %p77
      %p80 = scmp.ne.s32.totalorder %s65, %s79
      %p81 = scmp.eq.s32.totalorder %s22, 0
      %p82 = por %p80, %p81
      %s84 = sadd.s32 %s83, 1
      %p87 = scmp.eq.s32.totalorder %s16, 3
      %p88 = scmp.ne.s32.totalorder %s83, %s85
      %p89 = scmp.eq.s32.totalorder %s16, 0
      %p90 = por %p88, %p89
      %p91 = scmp.ne.s32.totalorder %s83, %s85
      %p92 = scmp.eq.s32.totalorder %s21, 3
      %p93 = por %p91, %p92
      %p94 = scmp.ne.s32.totalorder %s85, %s86
      %p95 = scmp.eq.s32.totalorder %s21, 0
      %p96 = por %p94, %p95
      %p97 = scmp.ne.s32.totalorder %s85, %s86
      %p98 = scmp.eq.s32.totalorder %s22, 3
      %p99 = por %p97, %p98
      %p101 = scmp.ne.s32.totalorder %s86, %s100
      %p102 = scmp.eq.s32.totalorder %s22, 0
      %p103 = por %p101, %p102
      %s105 = sadd.s32 %s104, 1
      %p108 = scmp.eq.s32.totalorder %s16, 3
      %p109 = scmp.ne.s32.totalorder %s104, %s106
      %p110 = scmp.eq.s32.totalorder %s16, 0
      %p111 = por %p109, %p110
      %p112 = scmp.ne.s32.totalorder %s104, %s106
      %p113 = scmp.eq.s32.totalorder %s21, 3
      %p114 = por %p112, %p113
      %p115 = scmp.ne.s32.totalorder %s106, %s107
      %p116 = scmp.eq.s32.totalorder %s21, 0
      %p117 = por %p115, %p116
      %p118 = scmp.ne.s32.totalorder %s106, %s107
      %p119 = scmp.eq.s32.totalorder %s22, 3
      %p120 = por %p118, %p119
      %p122 = scmp.ne.s32.totalorder %s107, %s121
      %p123 = scmp.eq.s32.totalorder %s22, 0
      %p124 = por %p122, %p123
      %s126 = sadd.s32 %s125, 1
      %p129 = scmp.eq.s32.totalorder %s16, 3
      %p130 = scmp.ne.s32.totalorder %s125, %s127
      %p131 = scmp.eq.s32.totalorder %s16, 0
      %p132 = por %p130, %p131
      %p133 = scmp.ne.s32.totalorder %s125, %s127
      %p134 = scmp.eq.s32.totalorder %s21, 3
      %p135 = por %p133, %p134
      %p136 = scmp.ne.s32.totalorder %s127, %s128
      %p137 = scmp.eq.s32.totalorder %s21, 0
      %p138 = por %p136, %p137
      %p139 = scmp.ne.s32.totalorder %s127, %s128
      %p140 = scmp.eq.s32.totalorder %s22, 3
      %p141 = por %p139, %p140
      %p143 = scmp.ne.s32.totalorder %s128, %s142
      %p144 = scmp.eq.s32.totalorder %s22, 0
      %p145 = por %p143, %p144
      %s146 = ssub.s32 %s24, %s31
      %p147 = scmp.eq.s32.totalorder %s146, 0
      %s149 = sadd.s32 %s148, 1
      %s150 = scalar_select %p147, %s148, %s149
      %p153 = pneg %p147
      %p154 = scmp.eq.s32.totalorder %s16, 3
      %p155 = por %p153, %p154
      %p156 = scmp.ne.s32.totalorder %s148, %s151
      %p157 = scmp.eq.s32.totalorder %s16, 0
      %p158 = por %p156, %p157
      %p159 = scmp.ne.s32.totalorder %s148, %s151
      %p160 = scmp.eq.s32.totalorder %s21, 3
      %p161 = por %p159, %p160
      %p162 = scmp.ne.s32.totalorder %s151, %s152
      %p163 = scmp.eq.s32.totalorder %s21, 0
      %p164 = por %p162, %p163
      %p165 = scmp.ne.s32.totalorder %s151, %s152
      %p166 = scmp.eq.s32.totalorder %s22, 3
      %p167 = por %p165, %p166
      %p169 = scmp.ne.s32.totalorder %s152, %s168
      %p170 = scmp.eq.s32.totalorder %s22, 0
      %p171 = por %p169, %p170
      %s172 = ssub.s32 %s24, %s31
      %p173 = scmp.eq.s32.totalorder %s172, 0
      %s175 = sadd.s32 %s174, 1
      %s176 = scalar_select %p173, %s174, %s175
      %p179 = pneg %p173
      %p180 = scmp.eq.s32.totalorder %s16, 3
      %p181 = por %p179, %p180
      %p182 = scmp.ne.s32.totalorder %s174, %s177
      %p183 = scmp.eq.s32.totalorder %s16, 0
      %p184 = por %p182, %p183
      %p185 = scmp.ne.s32.totalorder %s174, %s177
      %p186 = scmp.eq.s32.totalorder %s21, 3
      %p187 = por %p185, %p186
      %p188 = scmp.ne.s32.totalorder %s177, %s178
      %p189 = scmp.eq.s32.totalorder %s21, 0
      %p190 = por %p188, %p189
      %p191 = scmp.ne.s32.totalorder %s177, %s178
      %p192 = scmp.eq.s32.totalorder %s22, 3
      %p193 = por %p191, %p192
      %p195 = scmp.ne.s32.totalorder %s178, %s194
      %p196 = scmp.eq.s32.totalorder %s22, 0
      %p197 = por %p195, %p196
      %s198 = ssub.s32 %s23, %s35
      %s199 = ssub.s32 %s24, %s31
      %s200 = sor.u32 %s198, %s199
      %p201 = scmp.eq.s32.totalorder %s200, 0
      %s203 = sadd.s32 %s202, 1
      %s204 = scalar_select %p201, %s202, %s203
      %p207 = pneg %p201
      %p208 = scmp.eq.s32.totalorder %s16, 3
      %p209 = por %p207, %p208
      %p210 = scmp.ne.s32.totalorder %s202, %s205
      %p211 = scmp.eq.s32.totalorder %s16, 0
      %p212 = por %p210, %p211
      %p213 = scmp.ne.s32.totalorder %s202, %s205
      %p214 = scmp.eq.s32.totalorder %s21, 3
      %p215 = por %p213, %p214
      %p216 = scmp.ne.s32.totalorder %s205, %s206
      %p217 = scmp.eq.s32.totalorder %s21, 0
      %p218 = por %p216, %p217
      %p219 = scmp.ne.s32.totalorder %s205, %s206
      %p220 = scmp.eq.s32.totalorder %s22, 3
      %p221 = por %p219, %p220
      %p223 = scmp.ne.s32.totalorder %s206, %s222
      %p224 = scmp.eq.s32.totalorder %s22, 0
      %p225 = por %p223, %p224
      %p226 = scmp.le.s32.totalorder 1, %s16
      %p227 = scmp.lt.s32.totalorder %s16, 5
      %p228 = pnand %p226, %p227
      %p229 = pneg %p228
      // Predicated region
      $region9: #{tpu_custom_call.1} parent=5 // pred_check
        _
      $region10: #{tpu_custom_call.1} parent=5 // pred_check_branch
        %231 = sbr.rel (%p228) target = $region12
      $region11: #{tpu_custom_call.1} parent=5 // pred_region
        %s232 = ssub.s32 %s16, 1
        // Predicated region
        $region13: #{tpu_custom_call.1} parent=11 // pred_check
          %p233 = pneg %p75
        $region14: #{tpu_custom_call.1} parent=11 // pred_check_branch
          %235 = sbr.rel (%p233) target = $region16
        $region15: #{tpu_custom_call.1} parent=11 // pred_region
          _
        $region16: #{tpu_custom_call.1} parent=11 // pred_fallthru
          _
        // Predicated region
        $region17: #{tpu_custom_call.1} parent=11 // pred_check
          %p236 = pneg %p96
        $region18: #{tpu_custom_call.1} parent=11 // pred_check_branch
          %238 = sbr.rel (%p236) target = $region20
        $region19: #{tpu_custom_call.1} parent=11 // pred_region
          _
        $region20: #{tpu_custom_call.1} parent=11 // pred_fallthru
          _
        // Predicated region
        $region21: #{tpu_custom_call.1} parent=11 // pred_check
          %p239 = pneg %p117
        $region22: #{tpu_custom_call.1} parent=11 // pred_check_branch
          %241 = sbr.rel (%p239) target = $region24
        $region23: #{tpu_custom_call.1} parent=11 // pred_region
          _
        $region24: #{tpu_custom_call.1} parent=11 // pred_fallthru
          _
        // Predicated region
        $region25: #{tpu_custom_call.1} parent=11 // pred_check
          %p242 = pneg %p138
        $region26: #{tpu_custom_call.1} parent=11 // pred_check_branch
          %244 = sbr.rel (%p242) target = $region28
        $region27: #{tpu_custom_call.1} parent=11 // pred_region
          _
        $region28: #{tpu_custom_call.1} parent=11 // pred_fallthru
          _
      $region12: #{tpu_custom_call.1} parent=5 // pred_fallthru
        _
      %p245 = scmp.lt.s32.totalorder %s16, 4
      // Predicated region
      $region29: #{tpu_custom_call.1} parent=5 // pred_check
        %p246 = pneg %p245
      $region30: #{tpu_custom_call.1} parent=5 // pred_check_branch
        %248 = sbr.rel (%p246) target = $region32
      $region31: #{tpu_custom_call.1} parent=5 // pred_region
        // Predicated region
        $region33: #{tpu_custom_call.1} parent=31 // pred_check
          %p249 = pneg %p48
        $region34: #{tpu_custom_call.1} parent=31 // pred_check_branch
          %251 = sbr.rel (%p249) target = $region36
        $region35: #{tpu_custom_call.1} parent=31 // pred_region
          %s252 = smul.u32 13, %s23
          %s253 = ssub.s32 25, %s252
          %p254 = scmp.lt.s32.totalorder %s253, 13
          %s255 = scalar_select %p254, %s253, 13
          %s256 = smul.u32 128, %s255
          %p257 = scmp.lt.s32.totalorder %s252, 24
          %s258 = scalar_select %p257, %s252, 24
          %s259 = smul.addr %s258, 8
          %s260 = scalar_lea.vmem %s0, %s259
          %s261 = smul.u32 13, %s23
          %s262 = ssub.s32 25, %s261
          %p263 = scmp.lt.s32.totalorder %s262, 13
          %s264 = scalar_select %p263, %s262, 13
          %s265 = smul.u32 128, %s264
        $region36: #{tpu_custom_call.1} parent=31 // pred_fallthru
          _
        // Predicated region
        $region37: #{tpu_custom_call.1} parent=31 // pred_check
          %p266 = pneg %p158
        $region38: #{tpu_custom_call.1} parent=31 // pred_check_branch
          %268 = sbr.rel (%p266) target = $region40
        $region39: #{tpu_custom_call.1} parent=31 // pred_region
          %s269 = sand.u32 %s148, 1
          %s270 = sand.u32 %s148, 1
          %s271 = smul.addr %s270, 64
          %s272 = scalar_lea.vmem [#allocation3], %s271
          %s273 = smul.addr %s24, 4
          %s274 = scalar_lea.vmem %s5, %s273
          // Predicated region
          $region41: #{tpu_custom_call.1} parent=39 // pred_check
            _
          $region42: #{tpu_custom_call.1} parent=39 // pred_check_branch
            %276 = sbr.rel (0) target = $region44
          $region43: #{tpu_custom_call.1} parent=39 // pred_region
            // Predicated region
            $region45: #{tpu_custom_call.1} parent=43 // pred_check
              _
            $region46: #{tpu_custom_call.1} parent=43 // pred_check_branch
              %278 = sbr.rel target = $region48
            $region47: #{tpu_custom_call.1} parent=43 // pred_region
              // Predicated region
              $region60: #{tpu_custom_call.1} parent=47 // pred_check
                _
              $region61: #{tpu_custom_call.1} parent=47 // pred_check_branch
                %323 = sbr.rel (0) target = $region63
              $region62: #{tpu_custom_call.1} parent=47 // pred_region
                loop: start=0, step=1, limit=1
                $region64: #{tpu_custom_call.1} parent=62 // loop_pre_header
                  _
                $region65: #{tpu_custom_call.1} parent=62 // loop_header
                  %s325 = sphi 0, %s329
                  %p326 = scmp.ge.s32.totalorder %s325, 1
                  %s330 = sphi %s274, %s274
                  %s331 = sphi %s272, %s272
                $region66: #{tpu_custom_call.1} parent=62 // loop_header_branch
                  %328 = sbr.rel (%p326) target = $region70
                $region67: #{tpu_custom_call.1} parent=62 // loop_body
                  _
                $region68: #{tpu_custom_call.1} parent=62 // loop_footer
                  %s329 = sadd.s32 1, %s325
                $region69: #{tpu_custom_call.1} parent=62 // loop_footer_branch
                  %324 = sbr.rel target = $region65
                $region70: #{tpu_custom_call.1} parent=62 // loop_exit
                  _
                loop: start=0, step=1, limit=1
                $region71: #{tpu_custom_call.1} parent=62 // loop_pre_header
                  _
                $region72: #{tpu_custom_call.1} parent=62 // loop_header
                  %s334 = sphi 0, %s338
                  %p335 = scmp.ge.s32.totalorder %s334, 1
                  %s339 = sphi %s274, %s274
                  %s340 = sphi %s272, %s272
                $region73: #{tpu_custom_call.1} parent=62 // loop_header_branch
                  %337 = sbr.rel (%p335) target = $region77
                $region74: #{tpu_custom_call.1} parent=62 // loop_body
                  %v341 = vld [vmem:[%s339] sm:$0xf]
                  %342 = vst [vmem:[%s340] sm:$0xf] %v341
                  %v343 = vld [vmem:[%s339 + $0x8] sm:$0xf]
                  %344 = vst [vmem:[%s340 + $0x4] sm:$0xf] %v343
                  %v345 = vld [vmem:[%s339 + $0x10] sm:$0xf]
                  %346 = vst [vmem:[%s340 + $0x8] sm:$0xf] %v345
                  %v347 = vld [vmem:[%s339 + $0x18] sm:$0xf]
                  %348 = vst [vmem:[%s340 + $0xc] sm:$0xf] %v347
                  %v349 = vld [vmem:[%s339 + $0x20] sm:$0xf]
                  %350 = vst [vmem:[%s340 + $0x10] sm:$0xf] %v349
                  %v351 = vld [vmem:[%s339 + $0x28] sm:$0xf]
                  %352 = vst [vmem:[%s340 + $0x14] sm:$0xf] %v351
                  %v353 = vld [vmem:[%s339 + $0x30] sm:$0xf]
                  %354 = vst [vmem:[%s340 + $0x18] sm:$0xf] %v353
                  %v355 = vld [vmem:[%s339 + $0x38] sm:$0xf]
                  %356 = vst [vmem:[%s340 + $0x1c] sm:$0xf] %v355
                  %v357 = vld [vmem:[%s339 + $0x40] sm:$0xf]
                  %358 = vst [vmem:[%s340 + $0x20] sm:$0xf] %v357
                  %v359 = vld [vmem:[%s339 + $0x48] sm:$0xf]
                  %360 = vst [vmem:[%s340 + $0x24] sm:$0xf] %v359
                  %v361 = vld [vmem:[%s339 + $0x50] sm:$0xf]
                  %362 = vst [vmem:[%s340 + $0x28] sm:$0xf] %v361
                  %v363 = vld [vmem:[%s339 + $0x58] sm:$0xf]
                  %364 = vst [vmem:[%s340 + $0x2c] sm:$0xf] %v363
                  %v365 = vld [vmem:[%s339 + $0x60] sm:$0xf]
                  %366 = vst [vmem:[%s340 + $0x30] sm:$0xf] %v365
                  %v367 = vld [vmem:[%s339 + $0x68] sm:$0xf]
                  %368 = vst [vmem:[%s340 + $0x34] sm:$0xf] %v367
                  %v369 = vld [vmem:[%s339 + $0x70] sm:$0xf]
                  %370 = vst [vmem:[%s340 + $0x38] sm:$0xf] %v369
                  %v371 = vld [vmem:[%s339 + $0x78] sm:$0xf]
                  %372 = vst [vmem:[%s340 + $0x3c] sm:$0xf] %v371
                $region75: #{tpu_custom_call.1} parent=62 // loop_footer
                  %s338 = sadd.s32 1, %s334
                $region76: #{tpu_custom_call.1} parent=62 // loop_footer_branch
                  %333 = sbr.rel target = $region72
                $region77: #{tpu_custom_call.1} parent=62 // loop_exit
                  _
              $region63: #{tpu_custom_call.1} parent=47 // pred_fallthru
                _
            $region48: #{tpu_custom_call.1} parent=43 // pred_fallthru
              _
            // Predicated region
            $region49: #{tpu_custom_call.1} parent=43 // pred_check
              _
            $region50: #{tpu_custom_call.1} parent=43 // pred_check_branch
              %280 = sbr.rel (0) target = $region52
            $region51: #{tpu_custom_call.1} parent=43 // pred_region
              loop: start=0, step=1, limit=1
              $region53: #{tpu_custom_call.1} parent=51 // loop_pre_header
                _
              $region54: #{tpu_custom_call.1} parent=51 // loop_header
                %s283 = sphi 0, %s287
                %p284 = scmp.ge.s32.totalorder %s283, 1
                %s288 = sphi %s274, %s274
                %s289 = sphi %s272, %s272
              $region55: #{tpu_custom_call.1} parent=51 // loop_header_branch
                %286 = sbr.rel (%p284) target = $region59
              $region56: #{tpu_custom_call.1} parent=51 // loop_body
                %v290 = vld [vmem:[%s288] sm:$0xf]
                %291 = vst [vmem:[%s289] sm:$0xf] %v290
                %v292 = vld [vmem:[%s288 + $0x8] sm:$0xf]
                %293 = vst [vmem:[%s289 + $0x4] sm:$0xf] %v292
                %v294 = vld [vmem:[%s288 + $0x10] sm:$0xf]
                %295 = vst [vmem:[%s289 + $0x8] sm:$0xf] %v294
                %v296 = vld [vmem:[%s288 + $0x18] sm:$0xf]
                %297 = vst [vmem:[%s289 + $0xc] sm:$0xf] %v296
                %v298 = vld [vmem:[%s288 + $0x20] sm:$0xf]
                %299 = vst [vmem:[%s289 + $0x10] sm:$0xf] %v298
                %v300 = vld [vmem:[%s288 + $0x28] sm:$0xf]
                %301 = vst [vmem:[%s289 + $0x14] sm:$0xf] %v300
                %v302 = vld [vmem:[%s288 + $0x30] sm:$0xf]
                %303 = vst [vmem:[%s289 + $0x18] sm:$0xf] %v302
                %v304 = vld [vmem:[%s288 + $0x38] sm:$0xf]
                %305 = vst [vmem:[%s289 + $0x1c] sm:$0xf] %v304
                %v306 = vld [vmem:[%s288 + $0x40] sm:$0xf]
                %307 = vst [vmem:[%s289 + $0x20] sm:$0xf] %v306
                %v308 = vld [vmem:[%s288 + $0x48] sm:$0xf]
                %309 = vst [vmem:[%s289 + $0x24] sm:$0xf] %v308
                %v310 = vld [vmem:[%s288 + $0x50] sm:$0xf]
                %311 = vst [vmem:[%s289 + $0x28] sm:$0xf] %v310
                %v312 = vld [vmem:[%s288 + $0x58] sm:$0xf]
                %313 = vst [vmem:[%s289 + $0x2c] sm:$0xf] %v312
                %v314 = vld [vmem:[%s288 + $0x60] sm:$0xf]
                %315 = vst [vmem:[%s289 + $0x30] sm:$0xf] %v314
                %v316 = vld [vmem:[%s288 + $0x68] sm:$0xf]
                %317 = vst [vmem:[%s289 + $0x34] sm:$0xf] %v316
                %v318 = vld [vmem:[%s288 + $0x70] sm:$0xf]
                %319 = vst [vmem:[%s289 + $0x38] sm:$0xf] %v318
                %v320 = vld [vmem:[%s288 + $0x78] sm:$0xf]
                %321 = vst [vmem:[%s289 + $0x3c] sm:$0xf] %v320
              $region57: #{tpu_custom_call.1} parent=51 // loop_footer
                %s287 = sadd.s32 1, %s283
              $region58: #{tpu_custom_call.1} parent=51 // loop_footer_branch
                %282 = sbr.rel target = $region54
              $region59: #{tpu_custom_call.1} parent=51 // loop_exit
                _
            $region52: #{tpu_custom_call.1} parent=43 // pred_fallthru
              _
          $region44: #{tpu_custom_call.1} parent=39 // pred_fallthru
            _
          %373 = vnop
        $region40: #{tpu_custom_call.1} parent=31 // pred_fallthru
          _
        // Predicated region
        $region78: #{tpu_custom_call.1} parent=31 // pred_check
          %p374 = pneg %p184
        $region79: #{tpu_custom_call.1} parent=31 // pred_check_branch
          %376 = sbr.rel (%p374) target = $region81
        $region80: #{tpu_custom_call.1} parent=31 // pred_region
          %p377 = scmp.lt.s32.totalorder %s24, 1
          %s378 = scalar_select %p377, %s24, 1
          %s379 = scalar_lea.vmem %s6, %s378
        $region81: #{tpu_custom_call.1} parent=31 // pred_fallthru
          _
      $region32: #{tpu_custom_call.1} parent=5 // pred_fallthru
        _
      %p380 = scmp.le.s32.totalorder 1, %s16
      %p381 = scmp.lt.s32.totalorder %s16, 5
      %p382 = pnand %p380, %p381
      %p383 = pneg %p382
      // Predicated region
      $region82: #{tpu_custom_call.1} parent=5 // pred_check
        _
      $region83: #{tpu_custom_call.1} parent=5 // pred_check_branch
        %385 = sbr.rel (%p382) target = $region85
      $region84: #{tpu_custom_call.1} parent=5 // pred_region
        %s386 = ssub.s32 %s16, 1
        %s387 = sand.u32 %s151, 1
        %s388 = sand.u32 %s151, 1
        %s389 = smul.addr %s388, 64
        %s390 = scalar_lea.vmem [#allocation3], %s389
        // Predicated region
        $region86: #{tpu_custom_call.1} parent=84 // pred_check
          %p391 = pneg %p164
        $region87: #{tpu_custom_call.1} parent=84 // pred_check_branch
          %393 = sbr.rel (%p391) target = $region89
        $region88: #{tpu_custom_call.1} parent=84 // pred_region
          _
        $region89: #{tpu_custom_call.1} parent=84 // pred_fallthru
          _
        %s394 = smul.u32 13, %s25
        %s395 = ssub.s32 25, %s394
        %p396 = scmp.lt.s32.totalorder %s395, 13
        %s397 = scalar_select %p396, %s395, 13
        %s398 = smul.u32 128, %s397
        %p399 = scmp.lt.s32.totalorder %s394, 24
        %s400 = scalar_select %p399, %s394, 24
        %s401 = smul.addr %s400, 8
        %s402 = scalar_lea.vmem %s0, %s401
        %p403 = pneg %p54
        %p404 = pneg %p51
        %p405 = pneg %p75
        %p406 = pneg %p72
        %p407 = pneg %p96
        %p408 = pneg %p93
        %p409 = pneg %p117
        %p410 = pneg %p114
        %p411 = pneg %p138
        %p412 = pneg %p135
        %s413 = sand.u32 %s151, 1
        %s414 = sand.u32 %s151, 1
        %s415 = smul.addr %s414, 64
        %s416 = scalar_lea.vmem [#allocation3], %s415
        %p417 = pneg %p164
        %p418 = pneg %p161
        %p419 = scmp.lt.s32.totalorder %s26, 1
        %s420 = scalar_select %p419, %s26, 1
        %s421 = scalar_lea.vmem %s6, %s420
        %p422 = pneg %p190
        %p423 = pneg %p187
        %p424 = pneg %p218
        %p425 = pneg %p215
        %s426 = sand.u32 %s205, 1
        %s427 = scalar_lea.sflag [#allocation5], %s426
        %s428 = sand.u32 %s205, 1
        %s429 = smul.addr %s428, 52
        %s430 = scalar_lea.vmem [#allocation4], %s429
        %s431 = smul.u32 13, %s25
        %s432 = ssub.s32 25, %s431
        %p433 = scmp.lt.s32.totalorder %s432, 13
        %s434 = scalar_select %p433, %s432, 13
        %s435 = smul.u32 128, %s434
        %p436 = scmp.lt.s32.totalorder %s431, 24
        %s437 = scalar_select %p436, %s431, 24
        %s438 = smul.addr %s437, 8
        %s439 = scalar_lea.vmem %s0, %s438
        %s440 = smul.u32 13, %s25
        %s441 = ssub.s32 25, %s440
        %p442 = scmp.lt.s32.totalorder %s441, 13
        %s443 = scalar_select %p442, %s441, 13
        %s444 = smul.u32 128, %s443
        %p445 = scmp.lt.s32.totalorder %s26, 1
        %s446 = scalar_select %p445, %s26, 1
        %s447 = scalar_lea.vmem %s6, %s446
        %s448 = smul.u32 13, %s25
        %s449 = ssub.s32 25, %s448
        %p450 = scmp.lt.s32.totalorder %s449, 13
        %s451 = scalar_select %p450, %s449, 13
        %s452 = smul.u32 64, %s451
        %p454 = scmp.eq.s32.totalorder %s26, 0
        // Predicated region
        $region90: #{tpu_custom_call.1} parent=84 // pred_check
          %p455 = pneg %p454
        $region91: #{tpu_custom_call.1} parent=84 // pred_check_branch
          %457 = sbr.rel (%p455) target = $region93
        $region92: #{tpu_custom_call.1} parent=84 // pred_region
          %v458 = vld [vmem:[%s439] sm:$0xff]
          %v459 = vld [vmem:[%s439 + $0x8] sm:$0xff]
          %v460 = vld [vmem:[%s439 + $0x10] sm:$0xff]
          %v461 = vld [vmem:[%s439 + $0x18] sm:$0xff]
          %v462 = vld [vmem:[%s439 + $0x20] sm:$0xff]
          %v463 = vld [vmem:[%s439 + $0x28] sm:$0xff]
          %v464 = vld [vmem:[%s439 + $0x30] sm:$0xff]
          %v465 = vld [vmem:[%s439 + $0x38] sm:$0xff]
          %v466 = vld [vmem:[%s439 + $0x40] sm:$0xff]
          %v467 = vld [vmem:[%s439 + $0x48] sm:$0xff]
          %v468 = vld [vmem:[%s439 + $0x50] sm:$0xff]
          %v469 = vld [vmem:[%s439 + $0x58] sm:$0xff]
          %v470 = vld [vmem:[%s439 + $0x60] sm:$0xff]
          %v471 = vpack.c.bf16 %v459, %v458
          %v472 = vpack.c.bf16 %v461, %v460
          %v473 = vpack.c.bf16 %v463, %v462
          %v474 = vpack.c.bf16 %v465, %v464
          %v475 = vpack.c.bf16 %v467, %v466
          %v476 = vpack.c.bf16 %v469, %v468
          %v477 = vpack.c.bf16 %v470, %v470
          %v478 = vld [vmem:[%s1] sm:$0xf]
          %v479 = vld [vmem:[%s2] sm:$0x1]
          %v481 = vlaneseq
          %v482 = vshrl.u32 %v481, 7
          %v483 = vsub.s32 0, %v482
          %v484 = vrot.slane %v479, %v483
          %vm486 = vcmask 64512
          %v488 = vsel %vm486, %v471, 0
          %v491 = vsel %vm486, %v472, 0
          %v494 = vsel %vm486, %v473, 0
          %v497 = vsel %vm486, %v474, 0
          %v500 = vsel %vm486, %v475, 0
          %v503 = vsel %vm486, %v476, 0
          %v506 = vsel %vm486, %v477, 0
          %vm508 = vcmask 1043456
          %v510 = vsel %vm508, %v478, 0
          %512 = vmatprep.subr.bf16.mxu0 0
          %513 = vmatpush1.bf16.msra.mxu0 %v510
          %514 = vmatprep.subr.bf16.mxu0 0
          %515 = vmatpush1.bf16.msra.mxu0 0
          %516 = vmatprep.subr.bf16.mxu0 0
          %517 = vmatpush1.bf16.msra.mxu0 0
          %518 = vmatprep.subr.bf16.mxu0 0
          %519 = vmatpush1.bf16.msra.mxu0 0
          %520 = vmatprep.subr.bf16.mxu0 0
          %521 = vmatpush1.bf16.msra.mxu0 0
          %522 = vmatprep.subr.bf16.mxu0 0
          %523 = vmatpush1.bf16.msra.mxu0 0
          %524 = vmatprep.subr.bf16.mxu0 0
          %525 = vmatpush1.bf16.msra.mxu0 0
          %526 = vmatprep.subr.bf16.mxu0 0
          %527 = vmatpush1.bf16.msra.mxu0 0
          %528 = vmatprep.subr.bf16.mxu0 0
          %529 = vmatpush1.bf16.msra.mxu0 0
          %530 = vmatprep.subr.bf16.mxu0 0
          %531 = vmatpush1.bf16.msra.mxu0 0
          %532 = vmatprep.subr.bf16.mxu0 0
          %533 = vmatpush1.bf16.msra.mxu0 0
          %534 = vmatprep.subr.bf16.mxu0 0
          %535 = vmatpush1.bf16.msra.mxu0 0
          %536 = vmatprep.subr.bf16.mxu0 0
          %537 = vmatpush1.bf16.msra.mxu0 0
          %538 = vmatprep.subr.bf16.mxu0 0
          %539 = vmatpush1.bf16.msra.mxu0 0
          %540 = vmatprep.subr.bf16.mxu0 0
          %541 = vmatpush1.bf16.msra.mxu0 0
          %542 = vmatprep.subr.bf16.mxu0 0
          %543 = vmatpush1.bf16.msra.mxu0 0
          %544 = vmatprep.mubr.bf16.mxu0 0
          %545 = vmatmul.mubr.bf16.gmra.mrb[0].mxu0 %v488
          %v546 = vpop.f32.mrb[0].mxu0
          %v547 = vadd.f32 %v484, %v546
          %v548 = vpop.f32.mrb[0].mxu0
          %v549 = vpop.f32.mrb[0].mxu0
          %v550 = vadd.f32 %v484, %v549
          %v551 = vpop.f32.mrb[0].mxu0
          %552 = vmatprep.mubr.bf16.mxu0 0
          %553 = vmatmul.mubr.bf16.gmra.mrb[0].mxu0 %v491
          %v554 = vpop.f32.mrb[0].mxu0
          %v555 = vadd.f32 %v484, %v554
          %v556 = vpop.f32.mrb[0].mxu0
          %v557 = vpop.f32.mrb[0].mxu0
          %v558 = vadd.f32 %v484, %v557
          %v559 = vpop.f32.mrb[0].mxu0
          %560 = vmatprep.mubr.bf16.mxu0 0
          %561 = vmatmul.mubr.bf16.gmra.mrb[0].mxu0 %v494
          %v562 = vpop.f32.mrb[0].mxu0
          %v563 = vadd.f32 %v484, %v562
          %v564 = vpop.f32.mrb[0].mxu0
          %v565 = vpop.f32.mrb[0].mxu0
          %v566 = vadd.f32 %v484, %v565
          %v567 = vpop.f32.mrb[0].mxu0
          %568 = vmatprep.mubr.bf16.mxu0 0
          %569 = vmatmul.mubr.bf16.gmra.mrb[0].mxu0 %v497
          %v570 = vpop.f32.mrb[0].mxu0
          %v571 = vadd.f32 %v484, %v570
          %v572 = vpop.f32.mrb[0].mxu0
          %v573 = vpop.f32.mrb[0].mxu0
          %v574 = vadd.f32 %v484, %v573
          %v575 = vpop.f32.mrb[0].mxu0
          %576 = vmatprep.mubr.bf16.mxu0 0
          %577 = vmatmul.mubr.bf16.gmra.mrb[0].mxu0 %v500
          %v578 = vpop.f32.mrb[0].mxu0
          %v579 = vadd.f32 %v484, %v578
          %v580 = vpop.f32.mrb[0].mxu0
          %v581 = vpop.f32.mrb[0].mxu0
          %v582 = vadd.f32 %v484, %v581
          %v583 = vpop.f32.mrb[0].mxu0
          %584 = vmatprep.mubr.bf16.mxu0 0
          %585 = vmatmul.mubr.bf16.gmra.mrb[0].mxu0 %v503
          %v586 = vpop.f32.mrb[0].mxu0
          %v587 = vadd.f32 %v484, %v586
          %v588 = vpop.f32.mrb[0].mxu0
          %v589 = vpop.f32.mrb[0].mxu0
          %v590 = vadd.f32 %v484, %v589
          %v591 = vpop.f32.mrb[0].mxu0
          %592 = vmatprep.mubr.bf16.mxu0 0
          %593 = vmatmul.mubr.bf16.gmra.mrb[0].mxu0 %v506
          %v594 = vpop.f32.mrb[0].mxu0
          %v595 = vadd.f32 %v484, %v594
          %v596 = vpop.f32.mrb[0].mxu0
          %v597 = vpop.f32.mrb[0].mxu0
          %v598 = vpop.f32.mrb[0].mxu0
          %599 = vdwg.mxu0
          %v600 = vtanh.pop %v547
          %v601 = vtanh.pop %v550
          %v602 = vtanh.pop %v555
          %v603 = vtanh.pop %v558
          %v604 = vtanh.pop %v563
          %v605 = vtanh.pop %v566
          %v606 = vtanh.pop %v571
          %v607 = vtanh.pop %v574
          %v608 = vtanh.pop %v579
          %v609 = vtanh.pop %v582
          %v610 = vtanh.pop %v587
          %v611 = vtanh.pop %v590
          %v612 = vtanh.pop %v595
          %v613 = vpack.c.bf16 %v601, %v600
          %v614 = vpack.c.bf16 %v603, %v602
          %v615 = vpack.c.bf16 %v605, %v604
          %v616 = vpack.c.bf16 %v607, %v606
          %v617 = vpack.c.bf16 %v609, %v608
          %v618 = vpack.c.bf16 %v611, %v610
          %v619 = vpack.c.bf16 %v612, %v612
          %v620 = vld [vmem:[%s3] sm:$0xf]
          %v621 = vld [vmem:[%s3 + $0x4] sm:$0xf]
          %v622 = vld [vmem:[%s3 + $0x8] sm:$0xf]
          %v623 = vld [vmem:[%s3 + $0xc] sm:$0xf]
          %v624 = vld [vmem:[%s3 + $0x10] sm:$0xf]
          %v625 = vld [vmem:[%s3 + $0x14] sm:$0xf]
          %v626 = vld [vmem:[%s3 + $0x18] sm:$0xf]
          %v627 = vld [vmem:[%s3 + $0x1c] sm:$0xf]
          %v628 = vld [vmem:[%s3 + $0x20] sm:$0xf]
          %v629 = vld [vmem:[%s3 + $0x24] sm:$0xf]
          %v630 = vld [vmem:[%s3 + $0x28] sm:$0xf]
          %v631 = vld [vmem:[%s3 + $0x2c] sm:$0xf]
          %v632 = vld [vmem:[%s3 + $0x30] sm:$0xf]
          %v633 = vld [vmem:[%s3 + $0x34] sm:$0xf]
          %v634 = vld [vmem:[%s3 + $0x38] sm:$0xf]
          %v635 = vld [vmem:[%s3 + $0x3c] sm:$0xf]
          %v636 = vld [vmem:[%s4] sm:$0x1]
          %v638 = vlaneseq
          %v639 = vshrl.u32 %v638, 7
          %v640 = vsub.s32 0, %v639
          %v641 = vrot.slane %v636, %v640
          %v659 = vunpack.c.l.b16 %v620
          %v660 = vunpack.c.l.b16 %v621
          %v661 = vunpack.c.l.b16 %v622
          %v662 = vunpack.c.l.b16 %v623
          %v663 = vunpack.c.l.b16 %v624
          %v664 = vunpack.c.l.b16 %v625
          %v665 = vunpack.c.l.b16 %v626
          %v666 = vunpack.c.l.b16 %v627
          %v667 = vunpack.c.l.b16 %v628
          %v668 = vunpack.c.l.b16 %v629
          %v669 = vunpack.c.l.b16 %v630
          %v670 = vunpack.c.l.b16 %v631
          %v671 = vunpack.c.l.b16 %v632
          %v672 = vunpack.c.l.b16 %v633
          %v673 = vunpack.c.l.b16 %v634
          %v674 = vunpack.c.l.b16 %v635
          %v675 = vpack.c.b16 %v660, %v659
          %v676 = vpack.c.b16 %v662, %v661
          %v677 = vpack.c.b16 %v664, %v663
          %v678 = vpack.c.b16 %v666, %v665
          %v679 = vpack.c.b16 %v668, %v667
          %v680 = vpack.c.b16 %v670, %v669
          %v681 = vpack.c.b16 %v672, %v671
          %v682 = vpack.c.b16 %v674, %v673
          %691 = vmatprep.subr.bf16.mxu0 0
          %692 = vmatpush1.bf16.msra.mxu0 %v675
          %693 = vmatprep.subr.bf16.mxu0 0
          %694 = vmatpush1.bf16.msra.mxu0 %v676
          %695 = vmatprep.subr.bf16.mxu0 0
          %696 = vmatpush1.bf16.msra.mxu0 %v677
          %697 = vmatprep.subr.bf16.mxu0 0
          %698 = vmatpush1.bf16.msra.mxu0 %v678
          %699 = vmatprep.subr.bf16.mxu0 0
          %700 = vmatpush1.bf16.msra.mxu0 %v679
          %701 = vmatprep.subr.bf16.mxu0 0
          %702 = vmatpush1.bf16.msra.mxu0 %v680
          %703 = vmatprep.subr.bf16.mxu0 0
          %704 = vmatpush1.bf16.msra.mxu0 %v681
          %705 = vmatprep.subr.bf16.mxu0 0
          %706 = vmatpush1.bf16.msra.mxu0 %v682
          %707 = vmatprep.subr.bf16.mxu0 0
          %708 = vmatpush1.bf16.msra.mxu0 0
          %709 = vmatprep.subr.bf16.mxu0 0
          %710 = vmatpush1.bf16.msra.mxu0 0
          %711 = vmatprep.subr.bf16.mxu0 0
          %712 = vmatpush1.bf16.msra.mxu0 0
          %713 = vmatprep.subr.bf16.mxu0 0
          %714 = vmatpush1.bf16.msra.mxu0 0
          %715 = vmatprep.subr.bf16.mxu0 0
          %716 = vmatpush1.bf16.msra.mxu0 0
          %717 = vmatprep.subr.bf16.mxu0 0
          %718 = vmatpush1.bf16.msra.mxu0 0
          %719 = vmatprep.subr.bf16.mxu0 0
          %720 = vmatpush1.bf16.msra.mxu0 0
          %721 = vmatprep.subr.bf16.mxu0 0
          %722 = vmatpush1.bf16.msra.mxu0 0
          %723 = vmatprep.mubr.bf16.mxu0 0
          %724 = vmatmul.mubr.bf16.gmra.mrb[0].mxu0 %v613
          %v725 = vpop.f32.mrb[0].mxu0
          %v726 = vadd.f32 %v641, %v725
          %v727 = vpop.f32.mrb[0].mxu0
          %v728 = vpop.f32.mrb[0].mxu0
          %v729 = vadd.f32 %v641, %v728
          %v730 = vpop.f32.mrb[0].mxu0
          %731 = vmatprep.mubr.bf16.mxu0 0
          %732 = vmatmul.mubr.bf16.gmra.mrb[0].mxu0 %v614
          %v733 = vpop.f32.mrb[0].mxu0
          %v734 = vadd.f32 %v641, %v733
          %v735 = vpop.f32.mrb[0].mxu0
          %v736 = vpop.f32.mrb[0].mxu0
          %v737 = vadd.f32 %v641, %v736
          %v738 = vpop.f32.mrb[0].mxu0
          %739 = vmatprep.mubr.bf16.mxu0 0
          %740 = vmatmul.mubr.bf16.gmra.mrb[0].mxu0 %v615
          %v741 = vpop.f32.mrb[0].mxu0
          %v742 = vadd.f32 %v641, %v741
          %v743 = vpop.f32.mrb[0].mxu0
          %v744 = vpop.f32.mrb[0].mxu0
          %v745 = vadd.f32 %v641, %v744
          %v746 = vpop.f32.mrb[0].mxu0
          %747 = vmatprep.mubr.bf16.mxu0 0
          %748 = vmatmul.mubr.bf16.gmra.mrb[0].mxu0 %v616
          %v749 = vpop.f32.mrb[0].mxu0
          %v750 = vadd.f32 %v641, %v749
          %v751 = vpop.f32.mrb[0].mxu0
          %v752 = vpop.f32.mrb[0].mxu0
          %v753 = vadd.f32 %v641, %v752
          %v754 = vpop.f32.mrb[0].mxu0
          %755 = vmatprep.mubr.bf16.mxu0 0
          %756 = vmatmul.mubr.bf16.gmra.mrb[0].mxu0 %v617
          %v757 = vpop.f32.mrb[0].mxu0
          %v758 = vadd.f32 %v641, %v757
          %v759 = vpop.f32.mrb[0].mxu0
          %v760 = vpop.f32.mrb[0].mxu0
          %v761 = vadd.f32 %v641, %v760
          %v762 = vpop.f32.mrb[0].mxu0
          %763 = vmatprep.mubr.bf16.mxu0 0
          %764 = vmatmul.mubr.bf16.gmra.mrb[0].mxu0 %v618
          %v765 = vpop.f32.mrb[0].mxu0
          %v766 = vadd.f32 %v641, %v765
          %v767 = vpop.f32.mrb[0].mxu0
          %v768 = vpop.f32.mrb[0].mxu0
          %v769 = vadd.f32 %v641, %v768
          %v770 = vpop.f32.mrb[0].mxu0
          %771 = vmatprep.mubr.bf16.mxu0 0
          %772 = vmatmul.mubr.bf16.gmra.mrb[0].mxu0 %v619
          %v773 = vpop.f32.mrb[0].mxu0
          %v774 = vadd.f32 %v641, %v773
          %v775 = vpop.f32.mrb[0].mxu0
          %v776 = vpop.f32.mrb[0].mxu0
          %v777 = vpop.f32.mrb[0].mxu0
          %778 = vdwg.mxu0
          %v779 = vtanh.pop %v726
          %v780 = vtanh.pop %v729
          %v781 = vtanh.pop %v734
          %v782 = vtanh.pop %v737
          %v783 = vtanh.pop %v742
          %v784 = vtanh.pop %v745
          %v785 = vtanh.pop %v750
          %v786 = vtanh.pop %v753
          %v787 = vtanh.pop %v758
          %v788 = vtanh.pop %v761
          %v789 = vtanh.pop %v766
          %v790 = vtanh.pop %v769
          %v791 = vtanh.pop %v774
          %v792 = vpack.c.bf16 %v780, %v779
          %v793 = vpack.c.bf16 %v782, %v781
          %v794 = vpack.c.bf16 %v784, %v783
          %v795 = vpack.c.bf16 %v786, %v785
          %v796 = vpack.c.bf16 %v788, %v787
          %v797 = vpack.c.bf16 %v790, %v789
          %v798 = vpack.c.bf16 %v791, %v791
          %v806 = vunpack.c.l.b16 %v792
          %v807 = vunpack.c.h.b16 %v792
          %v808 = vunpack.c.l.b16 %v793
          %v809 = vunpack.c.h.b16 %v793
          %v810 = vunpack.c.l.b16 %v794
          %v811 = vunpack.c.h.b16 %v794
          %v812 = vunpack.c.l.b16 %v795
          %v813 = vunpack.c.h.b16 %v795
          %v814 = vunpack.c.l.b16 %v796
          %v815 = vunpack.c.h.b16 %v796
          %v816 = vunpack.c.l.b16 %v797
          %v817 = vunpack.c.h.b16 %v797
          %v818 = vunpack.c.l.b16 %v798
          %v819 = vpack.c.b16 %v806, %v806
          %v820 = vpack.c.b16 %v807, %v807
          %v821 = vpack.c.b16 %v808, %v808
          %v822 = vpack.c.b16 %v809, %v809
          %v823 = vpack.c.b16 %v810, %v810
          %v824 = vpack.c.b16 %v811, %v811
          %v825 = vpack.c.b16 %v812, %v812
          %v826 = vpack.c.b16 %v813, %v813
          %v827 = vpack.c.b16 %v814, %v814
          %v828 = vpack.c.b16 %v815, %v815
          %v829 = vpack.c.b16 %v816, %v816
          %v830 = vpack.c.b16 %v817, %v817
          %v831 = vpack.c.b16 %v818, %v818
          %845 = vst [vmem:[#allocation2] sm:$0xf] %v819
          %846 = vst [vmem:[#allocation2 + $0x4] sm:$0xf] %v820
          %847 = vst [vmem:[#allocation2 + $0x8] sm:$0xf] %v821
          %848 = vst [vmem:[#allocation2 + $0xc] sm:$0xf] %v822
          %849 = vst [vmem:[#allocation2 + $0x10] sm:$0xf] %v823
          %850 = vst [vmem:[#allocation2 + $0x14] sm:$0xf] %v824
          %851 = vst [vmem:[#allocation2 + $0x18] sm:$0xf] %v825
          %852 = vst [vmem:[#allocation2 + $0x1c] sm:$0xf] %v826
          %853 = vst [vmem:[#allocation2 + $0x20] sm:$0xf] %v827
          %854 = vst [vmem:[#allocation2 + $0x24] sm:$0xf] %v828
          %855 = vst [vmem:[#allocation2 + $0x28] sm:$0xf] %v829
          %856 = vst [vmem:[#allocation2 + $0x2c] sm:$0xf] %v830
          %857 = vst [vmem:[#allocation2 + $0x30] sm:$0xf] %v831
        $region93: #{tpu_custom_call.1} parent=84 // pred_fallthru
          _
        %v858 = vld [vmem:[#allocation2] sm:$0xf]
        %v859 = vld [vmem:[#allocation2 + $0x4] sm:$0xf]
        %v860 = vld [vmem:[#allocation2 + $0x8] sm:$0xf]
        %v861 = vld [vmem:[#allocation2 + $0xc] sm:$0xf]
        %v862 = vld [vmem:[#allocation2 + $0x10] sm:$0xf]
        %v863 = vld [vmem:[#allocation2 + $0x14] sm:$0xf]
        %v864 = vld [vmem:[#allocation2 + $0x18] sm:$0xf]
        %v865 = vld [vmem:[#allocation2 + $0x1c] sm:$0xf]
        %v866 = vld [vmem:[#allocation2 + $0x20] sm:$0xf]
        %v867 = vld [vmem:[#allocation2 + $0x24] sm:$0xf]
        %v868 = vld [vmem:[#allocation2 + $0x28] sm:$0xf]
        %v869 = vld [vmem:[#allocation2 + $0x2c] sm:$0xf]
        %v870 = vld [vmem:[#allocation2 + $0x30] sm:$0xf]
        %v871 = vld [vmem:[%s390] sm:$0xf]
        %v872 = vld [vmem:[%s390 + $0x4] sm:$0xf]
        %v873 = vld [vmem:[%s390 + $0x8] sm:$0xf]
        %v874 = vld [vmem:[%s390 + $0xc] sm:$0xf]
        %v875 = vld [vmem:[%s390 + $0x10] sm:$0xf]
        %v876 = vld [vmem:[%s390 + $0x14] sm:$0xf]
        %v877 = vld [vmem:[%s390 + $0x18] sm:$0xf]
        %v878 = vld [vmem:[%s390 + $0x1c] sm:$0xf]
        %v879 = vld [vmem:[%s390 + $0x20] sm:$0xf]
        %v880 = vld [vmem:[%s390 + $0x24] sm:$0xf]
        %v881 = vld [vmem:[%s390 + $0x28] sm:$0xf]
        %v882 = vld [vmem:[%s390 + $0x2c] sm:$0xf]
        %v883 = vld [vmem:[%s390 + $0x30] sm:$0xf]
        %v884 = vld [vmem:[%s390 + $0x34] sm:$0xf]
        %v885 = vld [vmem:[%s390 + $0x38] sm:$0xf]
        %v886 = vld [vmem:[%s390 + $0x3c] sm:$0xf]
        %v887 = vld [vmem:[%s447] sm:$0x1]
        %v889 = vlaneseq
        %v890 = vshrl.u32 %v889, 7
        %v891 = vsub.s32 0, %v890
        %v892 = vrot.slane %v887, %v891
        %v907 = vunpack.c.l.b16 %v858
        %v908 = vunpack.c.l.b16 %v859
        %v909 = vunpack.c.l.b16 %v860
        %v910 = vunpack.c.l.b16 %v861
        %v911 = vunpack.c.l.b16 %v862
        %v912 = vunpack.c.l.b16 %v863
        %v913 = vunpack.c.l.b16 %v864
        %v914 = vunpack.c.l.b16 %v865
        %v915 = vunpack.c.l.b16 %v866
        %v916 = vunpack.c.l.b16 %v867
        %v917 = vunpack.c.l.b16 %v868
        %v918 = vunpack.c.l.b16 %v869
        %v919 = vunpack.c.l.b16 %v870
        %v920 = vpack.c.b16 %v908, %v907
        %v921 = vpack.c.b16 %v910, %v909
        %v922 = vpack.c.b16 %v912, %v911
        %v923 = vpack.c.b16 %v914, %v913
        %v924 = vpack.c.b16 %v916, %v915
        %v925 = vpack.c.b16 %v918, %v917
        %v926 = vpack.c.b16 %v919, %v919
        %v950 = vunpack.c.l.b16 %v871
        %v951 = vunpack.c.l.b16 %v872
        %v952 = vunpack.c.l.b16 %v873
        %v953 = vunpack.c.l.b16 %v874
        %v954 = vunpack.c.l.b16 %v875
        %v955 = vunpack.c.l.b16 %v876
        %v956 = vunpack.c.l.b16 %v877
        %v957 = vunpack.c.l.b16 %v878
        %v958 = vunpack.c.l.b16 %v879
        %v959 = vunpack.c.l.b16 %v880
        %v960 = vunpack.c.l.b16 %v881
        %v961 = vunpack.c.l.b16 %v882
        %v962 = vunpack.c.l.b16 %v883
        %v963 = vunpack.c.l.b16 %v884
        %v964 = vunpack.c.l.b16 %v885
        %v965 = vunpack.c.l.b16 %v886
        %v966 = vpack.c.b16 %v951, %v950
        %v967 = vpack.c.b16 %v953, %v952
        %v968 = vpack.c.b16 %v955, %v954
        %v969 = vpack.c.b16 %v957, %v956
        %v970 = vpack.c.b16 %v959, %v958
        %v971 = vpack.c.b16 %v961, %v960
        %v972 = vpack.c.b16 %v963, %v962
        %v973 = vpack.c.b16 %v965, %v964
        %982 = vmatprep.subr.bf16.mxu0 0
        %983 = vmatpush1.bf16.msra.mxu0 %v966
        %984 = vmatprep.subr.bf16.mxu0 0
        %985 = vmatpush1.bf16.msra.mxu0 %v967
        %986 = vmatprep.subr.bf16.mxu0 0
        %987 = vmatpush1.bf16.msra.mxu0 %v968
        %988 = vmatprep.subr.bf16.mxu0 0
        %989 = vmatpush1.bf16.msra.mxu0 %v969
        %990 = vmatprep.subr.bf16.mxu0 0
        %991 = vmatpush1.bf16.msra.mxu0 %v970
        %992 = vmatprep.subr.bf16.mxu0 0
        %993 = vmatpush1.bf16.msra.mxu0 %v971
        %994 = vmatprep.subr.bf16.mxu0 0
        %995 = vmatpush1.bf16.msra.mxu0 %v972
        %996 = vmatprep.subr.bf16.mxu0 0
        %997 = vmatpush1.bf16.msra.mxu0 %v973
        %998 = vmatprep.subr.bf16.mxu0 0
        %999 = vmatpush1.bf16.msra.mxu0 0
        %1000 = vmatprep.subr.bf16.mxu0 0
        %1001 = vmatpush1.bf16.msra.mxu0 0
        %1002 = vmatprep.subr.bf16.mxu0 0
        %1003 = vmatpush1.bf16.msra.mxu0 0
        %1004 = vmatprep.subr.bf16.mxu0 0
        %1005 = vmatpush1.bf16.msra.mxu0 0
        %1006 = vmatprep.subr.bf16.mxu0 0
        %1007 = vmatpush1.bf16.msra.mxu0 0
        %1008 = vmatprep.subr.bf16.mxu0 0
        %1009 = vmatpush1.bf16.msra.mxu0 0
        %1010 = vmatprep.subr.bf16.mxu0 0
        %1011 = vmatpush1.bf16.msra.mxu0 0
        %1012 = vmatprep.subr.bf16.mxu0 0
        %1013 = vmatpush1.bf16.msra.mxu0 0
        %1014 = vmatprep.mubr.bf16.mxu0 0
        %1015 = vmatmul.mubr.bf16.gmra.mrb[0].mxu0 %v920
        %v1016 = vpop.f32.mrb[0].mxu0
        %v1017 = vadd.f32 %v892, %v1016
        %v1018 = vpop.f32.mrb[0].mxu0
        %v1019 = vpop.f32.mrb[0].mxu0
        %v1020 = vadd.f32 %v892, %v1019
        %v1021 = vpop.f32.mrb[0].mxu0
        %1022 = vmatprep.mubr.bf16.mxu0 0
        %1023 = vmatmul.mubr.bf16.gmra.mrb[0].mxu0 %v921
        %v1024 = vpop.f32.mrb[0].mxu0
        %v1025 = vadd.f32 %v892, %v1024
        %v1026 = vpop.f32.mrb[0].mxu0
        %v1027 = vpop.f32.mrb[0].mxu0
        %v1028 = vadd.f32 %v892, %v1027
        %v1029 = vpop.f32.mrb[0].mxu0
        %1030 = vmatprep.mubr.bf16.mxu0 0
        %1031 = vmatmul.mubr.bf16.gmra.mrb[0].mxu0 %v922
        %v1032 = vpop.f32.mrb[0].mxu0
        %v1033 = vadd.f32 %v892, %v1032
        %v1034 = vpop.f32.mrb[0].mxu0
        %v1035 = vpop.f32.mrb[0].mxu0
        %v1036 = vadd.f32 %v892, %v1035
        %v1037 = vpop.f32.mrb[0].mxu0
        %1038 = vmatprep.mubr.bf16.mxu0 0
        %1039 = vmatmul.mubr.bf16.gmra.mrb[0].mxu0 %v923
        %v1040 = vpop.f32.mrb[0].mxu0
        %v1041 = vadd.f32 %v892, %v1040
        %v1042 = vpop.f32.mrb[0].mxu0
        %v1043 = vpop.f32.mrb[0].mxu0
        %v1044 = vadd.f32 %v892, %v1043
        %v1045 = vpop.f32.mrb[0].mxu0
        %1046 = vmatprep.mubr.bf16.mxu0 0
        %1047 = vmatmul.mubr.bf16.gmra.mrb[0].mxu0 %v924
        %v1048 = vpop.f32.mrb[0].mxu0
        %v1049 = vadd.f32 %v892, %v1048
        %v1050 = vpop.f32.mrb[0].mxu0
        %v1051 = vpop.f32.mrb[0].mxu0
        %v1052 = vadd.f32 %v892, %v1051
        %v1053 = vpop.f32.mrb[0].mxu0
        %1054 = vmatprep.mubr.bf16.mxu0 0
        %1055 = vmatmul.mubr.bf16.gmra.mrb[0].mxu0 %v925
        %v1056 = vpop.f32.mrb[0].mxu0
        %v1057 = vadd.f32 %v892, %v1056
        %v1058 = vpop.f32.mrb[0].mxu0
        %v1059 = vpop.f32.mrb[0].mxu0
        %v1060 = vadd.f32 %v892, %v1059
        %v1061 = vpop.f32.mrb[0].mxu0
        %1062 = vmatprep.mubr.bf16.mxu0 0
        %1063 = vmatmul.mubr.bf16.gmra.mrb[0].mxu0 %v926
        %v1064 = vpop.f32.mrb[0].mxu0
        %v1065 = vadd.f32 %v892, %v1064
        %v1066 = vpop.f32.mrb[0].mxu0
        %v1067 = vpop.f32.mrb[0].mxu0
        %v1068 = vpop.f32.mrb[0].mxu0
        %1069 = vdwg.mxu0
        %v1070 = vxor.u32 %v1017, 2147483648
        %v1071 = vxor.u32 %v1020, 2147483648
        %v1072 = vxor.u32 %v1025, 2147483648
        %v1073 = vxor.u32 %v1028, 2147483648
        %v1074 = vxor.u32 %v1033, 2147483648
        %v1075 = vxor.u32 %v1036, 2147483648
        %v1076 = vxor.u32 %v1041, 2147483648
        %v1077 = vxor.u32 %v1044, 2147483648
        %v1078 = vxor.u32 %v1049, 2147483648
        %v1079 = vxor.u32 %v1052, 2147483648
        %v1080 = vxor.u32 %v1057, 2147483648
        %v1081 = vxor.u32 %v1060, 2147483648
        %v1082 = vxor.u32 %v1065, 2147483648
        %v1083 = vmul.f32 %v1070, 1.442695
        %v1084 = vpow.pop %v1083
        %v1085 = vmul.f32 %v1071, 1.442695
        %v1086 = vpow.pop %v1085
        %v1087 = vmul.f32 %v1072, 1.442695
        %v1088 = vpow.pop %v1087
        %v1089 = vmul.f32 %v1073, 1.442695
        %v1090 = vpow.pop %v1089
        %v1091 = vmul.f32 %v1074, 1.442695
        %v1092 = vpow.pop %v1091
        %v1093 = vmul.f32 %v1075, 1.442695
        %v1094 = vpow.pop %v1093
        %v1095 = vmul.f32 %v1076, 1.442695
        %v1096 = vpow.pop %v1095
        %v1097 = vmul.f32 %v1077, 1.442695
        %v1098 = vpow.pop %v1097
        %v1099 = vmul.f32 %v1078, 1.442695
        %v1100 = vpow.pop %v1099
        %v1101 = vmul.f32 %v1079, 1.442695
        %v1102 = vpow.pop %v1101
        %v1103 = vmul.f32 %v1080, 1.442695
        %v1104 = vpow.pop %v1103
        %v1105 = vmul.f32 %v1081, 1.442695
        %v1106 = vpow.pop %v1105
        %v1107 = vmul.f32 %v1082, 1.442695
        %v1108 = vpow.pop %v1107
        %v1109 = vadd.f32 %v1084, 1.0
        %v1110 = vadd.f32 %v1086, 1.0
        %v1111 = vadd.f32 %v1088, 1.0
        %v1112 = vadd.f32 %v1090, 1.0
        %v1113 = vadd.f32 %v1092, 1.0
        %v1114 = vadd.f32 %v1094, 1.0
        %v1115 = vadd.f32 %v1096, 1.0
        %v1116 = vadd.f32 %v1098, 1.0
        %v1117 = vadd.f32 %v1100, 1.0
        %v1118 = vadd.f32 %v1102, 1.0
        %v1119 = vadd.f32 %v1104, 1.0
        %v1120 = vadd.f32 %v1106, 1.0
        %v1121 = vadd.f32 %v1108, 1.0
        %v1122 = vrcp.pop %v1109
        %v1123 = vmul.f32 1.0, %v1122
        %v1124 = vrcp.pop %v1110
        %v1125 = vmul.f32 1.0, %v1124
        %v1126 = vrcp.pop %v1111
        %v1127 = vmul.f32 1.0, %v1126
        %v1128 = vrcp.pop %v1112
        %v1129 = vmul.f32 1.0, %v1128
        %v1130 = vrcp.pop %v1113
        %v1131 = vmul.f32 1.0, %v1130
        %v1132 = vrcp.pop %v1114
        %v1133 = vmul.f32 1.0, %v1132
        %v1134 = vrcp.pop %v1115
        %v1135 = vmul.f32 1.0, %v1134
        %v1136 = vrcp.pop %v1116
        %v1137 = vmul.f32 1.0, %v1136
        %v1138 = vrcp.pop %v1117
        %v1139 = vmul.f32 1.0, %v1138
        %v1140 = vrcp.pop %v1118
        %v1141 = vmul.f32 1.0, %v1140
        %v1142 = vrcp.pop %v1119
        %v1143 = vmul.f32 1.0, %v1142
        %v1144 = vrcp.pop %v1120
        %v1145 = vmul.f32 1.0, %v1144
        %v1146 = vrcp.pop %v1121
        %v1147 = vmul.f32 1.0, %v1146
        %v1148 = vpack.c.bf16 %v1125, %v1123
        %v1149 = vpack.c.bf16 %v1129, %v1127
        %v1150 = vpack.c.bf16 %v1133, %v1131
        %v1151 = vpack.c.bf16 %v1137, %v1135
        %v1152 = vpack.c.bf16 %v1141, %v1139
        %v1153 = vpack.c.bf16 %v1145, %v1143
        %v1154 = vpack.c.bf16 %v1147, %v1147
        %v1162 = vunpack.c.l.b16 %v1148
        %v1163 = vunpack.c.h.b16 %v1148
        %v1164 = vunpack.c.l.b16 %v1149
        %v1165 = vunpack.c.h.b16 %v1149
        %v1166 = vunpack.c.l.b16 %v1150
        %v1167 = vunpack.c.h.b16 %v1150
        %v1168 = vunpack.c.l.b16 %v1151
        %v1169 = vunpack.c.h.b16 %v1151
        %v1170 = vunpack.c.l.b16 %v1152
        %v1171 = vunpack.c.h.b16 %v1152
        %v1172 = vunpack.c.l.b16 %v1153
        %v1173 = vunpack.c.h.b16 %v1153
        %v1174 = vunpack.c.l.b16 %v1154
        %v1175 = vpack.c.b16 %v1162, %v1162
        %v1176 = vpack.c.b16 %v1163, %v1163
        %v1177 = vpack.c.b16 %v1164, %v1164
        %v1178 = vpack.c.b16 %v1165, %v1165
        %v1179 = vpack.c.b16 %v1166, %v1166
        %v1180 = vpack.c.b16 %v1167, %v1167
        %v1181 = vpack.c.b16 %v1168, %v1168
        %v1182 = vpack.c.b16 %v1169, %v1169
        %v1183 = vpack.c.b16 %v1170, %v1170
        %v1184 = vpack.c.b16 %v1171, %v1171
        %v1185 = vpack.c.b16 %v1172, %v1172
        %v1186 = vpack.c.b16 %v1173, %v1173
        %v1187 = vpack.c.b16 %v1174, %v1174
        %1201 = vst [vmem:[%s430] sm:$0xf] %v1175
        %1202 = vst [vmem:[%s430 + $0x4] sm:$0xf] %v1176
        %1203 = vst [vmem:[%s430 + $0x8] sm:$0xf] %v1177
        %1204 = vst [vmem:[%s430 + $0xc] sm:$0xf] %v1178
        %1205 = vst [vmem:[%s430 + $0x10] sm:$0xf] %v1179
        %1206 = vst [vmem:[%s430 + $0x14] sm:$0xf] %v1180
        %1207 = vst [vmem:[%s430 + $0x18] sm:$0xf] %v1181
        %1208 = vst [vmem:[%s430 + $0x1c] sm:$0xf] %v1182
        %1209 = vst [vmem:[%s430 + $0x20] sm:$0xf] %v1183
        %1210 = vst [vmem:[%s430 + $0x24] sm:$0xf] %v1184
        %1211 = vst [vmem:[%s430 + $0x28] sm:$0xf] %v1185
        %1212 = vst [vmem:[%s430 + $0x2c] sm:$0xf] %v1186
        %1213 = vst [vmem:[%s430 + $0x30] sm:$0xf] %v1187
        %s1214 = sand.u32 %s205, 1
        %s1215 = scalar_lea.sflag [#allocation5], %s1214
        %s1216 = sand.u32 %s205, 1
        %s1217 = smul.addr %s1216, 52
        %s1218 = scalar_lea.vmem [#allocation4], %s1217
        // Predicated region
        $region94: #{tpu_custom_call.1} parent=84 // pred_check
          %p1219 = pneg %p215
        $region95: #{tpu_custom_call.1} parent=84 // pred_check_branch
          %1221 = sbr.rel (%p1219) target = $region97
        $region96: #{tpu_custom_call.1} parent=84 // pred_region
          %s1222 = smul.u32 13, %s25
          %s1223 = ssub.s32 25, %s1222
          %p1224 = scmp.lt.s32.totalorder %s1223, 13
          %s1225 = scalar_select %p1224, %s1223, 13
          %s1226 = smul.u32 64, %s1225
          %s1228 = ssub.s32 832, %s1226
          %1229 = vsyncadd %s1215, %s1228
          %p1230 = scmp.ne.s32.totalorder 0, %s1226
          %s1231 = smul.addr %s1222, 2
          %s1232 = sadd.s32 %s26, %s1231
          %s1233 = smul.addr %s1232, 64
          %s1234 = scalar_lea.hbm %s7, %s1233
          %s1235 = smul.u32 4, %s1225
          %s1236 = sshll.u32 %s1218, 4
          %s1237 = int_to_ptr.vmem [resolvable:$true] %s1236
          %s1238 = sshll.u32 %s1235, 4
          %1242 = dma.vmem_to_hbm [thread:$0]  (%p1230), %s1237, %s1238, %s1234, %s1215, 64, 128, 4
        $region97: #{tpu_custom_call.1} parent=84 // pred_fallthru
          _
      $region85: #{tpu_custom_call.1} parent=5 // pred_fallthru
        _
      %p1243 = scmp.le.s32.totalorder 2, %s16
      // Predicated region
      $region98: #{tpu_custom_call.1} parent=5 // pred_check
        %p1244 = pneg %p1243
      $region99: #{tpu_custom_call.1} parent=5 // pred_check_branch
        %1246 = sbr.rel (%p1244) target = $region101
      $region100: #{tpu_custom_call.1} parent=5 // pred_region
        %s1247 = ssub.s32 %s16, 2
        // Predicated region
        $region102: #{tpu_custom_call.1} parent=100 // pred_check
          %p1248 = pneg %p221
        $region103: #{tpu_custom_call.1} parent=100 // pred_check_branch
          %1250 = sbr.rel (%p1248) target = $region105
        $region104: #{tpu_custom_call.1} parent=100 // pred_region
          %s1251 = sand.u32 %s206, 1
          %s1252 = scalar_lea.sflag [#allocation5], %s1251
          %s1253 = sand.u32 %s206, 1
          %s1254 = smul.addr %s1253, 52
          %s1255 = scalar_lea.vmem [#allocation4], %s1254
          %1256 = dma.done %s1252, 832
        $region105: #{tpu_custom_call.1} parent=100 // pred_fallthru
          _
      $region101: #{tpu_custom_call.1} parent=5 // pred_fallthru
        _
    $region6: #{tpu_custom_call.1} parent=1 // loop_footer
      %s20 = sadd.s32 1, %s16
    $region7: #{tpu_custom_call.1} parent=1 // loop_footer_branch
      %15 = sbr.rel target = $region3
    $region8: #{tpu_custom_call.1} parent=1 // loop_exit
      _
    %1257 = vsyncpa [#allocation5], 1
    %s1258 = scalar_lea.sflag [#allocation5], 1
    %1259 = vsyncpa %s1258, 1

</llo_original>
